<compile_context>
chip_gen: v7x
topology: tpu7x:2x2x1
jax: 0.10.0
libtpu: 0.0.40
codegen_flags: <defaults>
</compile_context>

<pallas_src>
import jax
import jax.numpy as jnp
from jax import lax
from jax.experimental import pallas as pl
from jax.experimental.pallas import tpu as pltpu


def _round_up(n, m):
    return ((n + m - 1) // m) * m


def _mlp_kernel(x_ref,
                w1_ref, b1_ref,
                w2_ref, b2_ref,
                w3_ref, b3_ref,
                w4_ref, b4_ref,
                o_ref):
    x = x_ref[...]                                    # [TB, 4]   f32
    w1 = w1_ref[...]                                  # [4, 256]  f32 (tiny)

    # ---- Layer 1: K=4 contraction as 4 VPU broadcast FMAs (f32). ----------
    h = (x[:, 0:1] * w1[0:1, :]
         + x[:, 1:2] * w1[1:2, :]
         + x[:, 2:3] * w1[2:3, :]
         + x[:, 3:4] * w1[3:4, :]) + b1_ref[...]      # [TB, 256] f32
    h = jnp.maximum(h, 0.0).astype(jnp.bfloat16)      # cast once for the MXU

    # ---- Layer 2: bf16 MXU, f32 accumulate, bf16 epilogue (bias + ReLU). --
    h = jnp.dot(h, w2_ref[...], preferred_element_type=jnp.float32)
    h = jnp.maximum(h.astype(jnp.bfloat16) + b2_ref[...], 0)   # [TB,256] bf16

    # ---- Layer 3 ----------------------------------------------------------
    h = jnp.dot(h, w3_ref[...], preferred_element_type=jnp.float32)
    h = jnp.maximum(h.astype(jnp.bfloat16) + b3_ref[...], 0)   # [TB,128] bf16

    # ---- Layer 4: out-dim zero-padded to 128 -> lane-dense f32 store. -----
    out = jnp.dot(h, w4_ref[...], preferred_element_type=jnp.float32) \
        + b4_ref[...]                                 # [TB, 128] f32
    o_ref[...] = out.astype(o_ref.dtype)


def _build_call(tb, b_pad, operands, single_buffer_weights):
    def resident_spec(arr):
        zeros = (0,) * arr.ndim
        kwargs = {}
        if single_buffer_weights:
            # Constant index_map already avoids re-DMA across grid steps;
            # Buffered(1) also drops the useless second buffer + bookkeeping.
            kwargs["pipeline_mode"] = pl.Buffered(1)
        return pl.BlockSpec(arr.shape, lambda i, _z=zeros: _z, **kwargs)

    in_specs = [pl.BlockSpec((tb, 4), lambda i: (i, 0))] + \
               [resident_spec(a) for a in operands[1:]]

    return pl.pallas_call(
        _mlp_kernel,
        out_shape=jax.ShapeDtypeStruct((b_pad, 128), jnp.float32),
        grid=(b_pad // tb,),
        in_specs=in_specs,
        out_specs=pl.BlockSpec((tb, 128), lambda i: (i, 0)),
        compiler_params=pltpu.CompilerParams(
            # "parallel" lets v7x shard the batch grid over its 2 TensorCores.
            # If a trace shows no 2-TC split, try pltpu.CORE_PARALLEL here.
            dimension_semantics=("parallel",)),
    )


def net_forward(x, params, *, block_b=1024):
    """x: [B, 4] (or [4]) float32.  params: see prepare_params()."""
    squeeze = x.ndim == 1
    if squeeze:
        x = x[None, :]
    B = x.shape[0]

    # Tile selection: sublane-aligned, big tiles (per-step overhead dominates),
    # and >= 2 grid steps whenever the batch allows so both v7x TCs get work.
    b_aligned = max(8, _round_up(B, 8))
    if b_aligned < 16:
        steps, tb = 1, b_aligned
    else:
        steps = max(2, pl.cdiv(b_aligned, block_b))
        tb = _round_up(pl.cdiv(b_aligned, steps), 8)
    b_pad = tb * steps
    if b_pad != B:
        x = jnp.pad(x, ((0, b_pad - B), (0, 0)))

    operands = (
        x,
        params["w1"], params["b1"],
        params["w2"], params["b2"],
        params["w3"], params["b3"],
        params["w4"], params["b4"],
    )

    try:
        out = _build_call(tb, b_pad, operands, True)(*operands)
    except Exception:
        # Fallback if this JAX build rejects pipeline_mode=pl.Buffered(1).
        out = _build_call(tb, b_pad, operands, False)(*operands)

    out = out[:B, :4]
    return out[0] if squeeze else out


def init_params(key):
    """torch.nn.Linear default init: U[-1/sqrt(fan_in), 1/sqrt(fan_in)], f32."""
    dims = [(4, 256), (256, 256), (256, 128), (128, 4)]
    params = {}
    for idx, (fan_in, fan_out) in enumerate(dims, start=1):
        key, kw, kb = jax.random.split(key, 3)
        bound = 1.0 / jnp.sqrt(jnp.float32(fan_in))
        params[f"w{idx}"] = jax.random.uniform(
            kw, (fan_in, fan_out), jnp.float32, minval=-bound, maxval=bound)
        params[f"b{idx}"] = jax.random.uniform(
            kb, (1, fan_out), jnp.float32, minval=-bound, maxval=bound)
    return params


def prepare_params(f32):
    """Kernel-side params: w1/b1 f32 (VPU layer), w2/b2/w3/b3 bf16 (MXU + bf16
    epilogue), layer-4 zero-padded to out-dim 128 (w4 bf16, b4 f32)."""
    p = {
        "w1": f32["w1"], "b1": f32["b1"],
        "w2": f32["w2"].astype(jnp.bfloat16),
        "b2": f32["b2"].astype(jnp.bfloat16),
        "w3": f32["w3"].astype(jnp.bfloat16),
        "b3": f32["b3"].astype(jnp.bfloat16),
    }
    w4 = jnp.zeros((128, 128), jnp.float32).at[:, :4].set(f32["w4"])
    b4 = jnp.zeros((1, 128), jnp.float32).at[:, :4].set(f32["b4"])
    p["w4"] = w4.astype(jnp.bfloat16)
    p["b4"] = b4
    return p


def _reference_forward(x, params):
    """Pure-JAX reference following the exact dtype path of the kernel."""
    w1, b1 = params["w1"], params["b1"]
    h = (x[:, 0:1] * w1[0:1, :] + x[:, 1:2] * w1[1:2, :]
         + x[:, 2:3] * w1[2:3, :] + x[:, 3:4] * w1[3:4, :]) + b1
    h = jnp.maximum(h, 0.0).astype(jnp.bfloat16)
    h = jnp.dot(h, params["w2"], preferred_element_type=jnp.float32)
    h = jnp.maximum(h.astype(jnp.bfloat16) + params["b2"], 0)
    h = jnp.dot(h, params["w3"], preferred_element_type=jnp.float32)
    h = jnp.maximum(h.astype(jnp.bfloat16) + params["b3"], 0)
    out = jnp.dot(h, params["w4"], preferred_element_type=jnp.float32) \
        + params["b4"]
    return out[:, :4]


def _reference_forward_f32(x, f32):
    """Full-precision reference matching the original PyTorch Net."""
    hp = lax.Precision.HIGHEST
    h = jnp.maximum(jnp.dot(x, f32["w1"], precision=hp) + f32["b1"], 0.0)
    h = jnp.maximum(jnp.dot(h, f32["w2"], precision=hp) + f32["b2"], 0.0)
    h = jnp.maximum(jnp.dot(h, f32["w3"], precision=hp) + f32["b3"], 0.0)
    return jnp.dot(h, f32["w4"], precision=hp) + f32["b4"]


if __name__ == "__main__":
    key = jax.random.PRNGKey(0)
    key, kx_small, kx_big = jax.random.split(key, 3)
    f32_params = init_params(key)
    params = prepare_params(f32_params)

    # Small single-step case (matches the RL usage pattern).
    x = jax.random.normal(kx_small, (2, 4), dtype=jnp.float32)
    out = jax.block_until_ready(net_forward(x, params))
    assert out.shape == (2, 4)
    assert jnp.allclose(out, _reference_forward(x, params),
                        atol=2e-2, rtol=2e-2), "mismatch vs matched ref (B=2)"
    assert jnp.allclose(out, _reference_forward_f32(x, f32_params),
                        atol=5e-2, rtol=5e-2), "bf16 drift vs f32 Net (B=2)"

    # Larger batch exercises the tiled grid (>=2 steps) + resident weights.
    xb = jax.random.normal(kx_big, (512, 4), dtype=jnp.float32)
    outb = jax.block_until_ready(net_forward(xb, params))
    assert outb.shape == (512, 4)
    assert jnp.allclose(outb, _reference_forward(xb, params),
                        atol=2e-2, rtol=2e-2), "mismatch vs matched ref (B=512)"
    assert jnp.allclose(outb, _reference_forward_f32(xb, f32_params),
                        atol=5e-2, rtol=5e-2), "bf16 drift vs f32 Net (B=512)"

    print("KERNEL_OK")
</pallas_src>

<mosaic_0001>
module attributes {stable_mosaic.version = 11 : i64} {
  func.func @_mlp_kernel(%arg0: i32, %arg1: memref<8x4xf32, #tpu.memory_space<vmem>>, %arg2: memref<4x256xf32, #tpu.memory_space<vmem>>, %arg3: memref<1x256xf32, #tpu.memory_space<vmem>>, %arg4: memref<256x256xbf16, #tpu.memory_space<vmem>>, %arg5: memref<1x256xbf16, #tpu.memory_space<vmem>>, %arg6: memref<256x128xbf16, #tpu.memory_space<vmem>>, %arg7: memref<1x128xbf16, #tpu.memory_space<vmem>>, %arg8: memref<128x128xbf16, #tpu.memory_space<vmem>>, %arg9: memref<1x128xf32, #tpu.memory_space<vmem>>, %arg10: memref<8x128xf32, #tpu.memory_space<vmem>>) attributes {dimension_semantics = [#tpu.dimension_semantics<parallel>], iteration_bounds = array<i64: 1>, scalar_prefetch = 0 : i64, scratch_operands = 0 : i64, tpu.core_type = #tpu.core_type<tc>, window_params = [{transform_indices = @transform_0, window_bounds = array<i64: 8, 4>}, {pipeline_mode = #tpu.pipeline_mode<synchronous>, transform_indices = @transform_1, window_bounds = array<i64: 4, 256>}, {pipeline_mode = #tpu.pipeline_mode<synchronous>, transform_indices = @transform_2, window_bounds = array<i64: 1, 256>}, {pipeline_mode = #tpu.pipeline_mode<synchronous>, transform_indices = @transform_3, window_bounds = array<i64: 256, 256>}, {pipeline_mode = #tpu.pipeline_mode<synchronous>, transform_indices = @transform_4, window_bounds = array<i64: 1, 256>}, {pipeline_mode = #tpu.pipeline_mode<synchronous>, transform_indices = @transform_5, window_bounds = array<i64: 256, 128>}, {pipeline_mode = #tpu.pipeline_mode<synchronous>, transform_indices = @transform_6, window_bounds = array<i64: 1, 128>}, {pipeline_mode = #tpu.pipeline_mode<synchronous>, transform_indices = @transform_7, window_bounds = array<i64: 128, 128>}, {pipeline_mode = #tpu.pipeline_mode<synchronous>, transform_indices = @transform_8, window_bounds = array<i64: 1, 128>}, {transform_indices = @transform_9, window_bounds = array<i64: 8, 128>}]} {
    %c0 = arith.constant 0 : index
    %c0_0 = arith.constant 0 : index
    %0 = vector.load %arg1[%c0, %c0_0] : memref<8x4xf32, #tpu.memory_space<vmem>>, vector<8x4xf32>
    %c0_1 = arith.constant 0 : index
    %c0_2 = arith.constant 0 : index
    %1 = vector.load %arg2[%c0_1, %c0_2] : memref<4x256xf32, #tpu.memory_space<vmem>>, vector<4x256xf32>
    %2 = vector.extract_strided_slice %0 {offsets = [0, 0], sizes = [8, 1], strides = [1, 1]} : vector<8x4xf32> to vector<8x1xf32>
    %3 = vector.extract_strided_slice %1 {offsets = [0, 0], sizes = [1, 256], strides = [1, 1]} : vector<4x256xf32> to vector<1x256xf32>
    %4 = vector.broadcast %2 : vector<8x1xf32> to vector<8x256xf32>
    %5 = vector.broadcast %3 : vector<1x256xf32> to vector<8x256xf32>
    %6 = arith.mulf %4, %5 : vector<8x256xf32>
    %7 = vector.extract_strided_slice %0 {offsets = [0, 1], sizes = [8, 1], strides = [1, 1]} : vector<8x4xf32> to vector<8x1xf32>
    %8 = vector.extract_strided_slice %1 {offsets = [1, 0], sizes = [1, 256], strides = [1, 1]} : vector<4x256xf32> to vector<1x256xf32>
    %9 = vector.broadcast %7 : vector<8x1xf32> to vector<8x256xf32>
    %10 = vector.broadcast %8 : vector<1x256xf32> to vector<8x256xf32>
    %11 = arith.mulf %9, %10 : vector<8x256xf32>
    %12 = arith.addf %6, %11 : vector<8x256xf32>
    %13 = vector.extract_strided_slice %0 {offsets = [0, 2], sizes = [8, 1], strides = [1, 1]} : vector<8x4xf32> to vector<8x1xf32>
    %14 = vector.extract_strided_slice %1 {offsets = [2, 0], sizes = [1, 256], strides = [1, 1]} : vector<4x256xf32> to vector<1x256xf32>
    %15 = vector.broadcast %13 : vector<8x1xf32> to vector<8x256xf32>
    %16 = vector.broadcast %14 : vector<1x256xf32> to vector<8x256xf32>
    %17 = arith.mulf %15, %16 : vector<8x256xf32>
    %18 = arith.addf %12, %17 : vector<8x256xf32>
    %19 = vector.extract_strided_slice %0 {offsets = [0, 3], sizes = [8, 1], strides = [1, 1]} : vector<8x4xf32> to vector<8x1xf32>
    %20 = vector.extract_strided_slice %1 {offsets = [3, 0], sizes = [1, 256], strides = [1, 1]} : vector<4x256xf32> to vector<1x256xf32>
    %21 = vector.broadcast %19 : vector<8x1xf32> to vector<8x256xf32>
    %22 = vector.broadcast %20 : vector<1x256xf32> to vector<8x256xf32>
    %23 = arith.mulf %21, %22 : vector<8x256xf32>
    %24 = arith.addf %18, %23 : vector<8x256xf32>
    %c0_3 = arith.constant 0 : index
    %c0_4 = arith.constant 0 : index
    %25 = vector.load %arg3[%c0_3, %c0_4] : memref<1x256xf32, #tpu.memory_space<vmem>>, vector<1x256xf32>
    %26 = vector.broadcast %25 : vector<1x256xf32> to vector<8x256xf32>
    %27 = arith.addf %24, %26 : vector<8x256xf32>
    %cst = arith.constant 0.000000e+00 : f32
    %28 = vector.broadcast %cst : f32 to vector<8x256xf32>
    %29 = arith.maximumf %27, %28 : vector<8x256xf32>
    %30 = arith.truncf %29 : vector<8x256xf32> to vector<8x256xbf16>
    %c0_5 = arith.constant 0 : index
    %c0_6 = arith.constant 0 : index
    %31 = vector.load %arg4[%c0_5, %c0_6] : memref<256x256xbf16, #tpu.memory_space<vmem>>, vector<256x256xbf16>
    %cst_7 = arith.constant dense<0.000000e+00> : vector<8x256xf32>
    %32 = tpu.matmul %30, %31, %cst_7 {dimension_numbers = #tpu.dot_dimension_numbers<[1], [0], [0], [1], [0, 0, 1, 1], [], []>} : vector<8x256xbf16>, vector<256x256xbf16>, vector<8x256xf32> -> vector<8x256xf32>
    %33 = arith.truncf %32 : vector<8x256xf32> to vector<8x256xbf16>
    %c0_8 = arith.constant 0 : index
    %c0_9 = arith.constant 0 : index
    %34 = vector.load %arg5[%c0_8, %c0_9] : memref<1x256xbf16, #tpu.memory_space<vmem>>, vector<1x256xbf16>
    %35 = vector.broadcast %34 : vector<1x256xbf16> to vector<8x256xbf16>
    %36 = arith.addf %33, %35 : vector<8x256xbf16>
    %cst_10 = arith.constant 0.000000e+00 : bf16
    %37 = vector.broadcast %cst_10 : bf16 to vector<8x256xbf16>
    %38 = arith.maximumf %36, %37 : vector<8x256xbf16>
    %c0_11 = arith.constant 0 : index
    %c0_12 = arith.constant 0 : index
    %39 = vector.load %arg6[%c0_11, %c0_12] : memref<256x128xbf16, #tpu.memory_space<vmem>>, vector<256x128xbf16>
    %cst_13 = arith.constant dense<0.000000e+00> : vector<8x128xf32>
    %40 = tpu.matmul %38, %39, %cst_13 {dimension_numbers = #tpu.dot_dimension_numbers<[1], [0], [0], [1], [0, 0, 1, 1], [], []>} : vector<8x256xbf16>, vector<256x128xbf16>, vector<8x128xf32> -> vector<8x128xf32>
    %41 = arith.truncf %40 : vector<8x128xf32> to vector<8x128xbf16>
    %c0_14 = arith.constant 0 : index
    %c0_15 = arith.constant 0 : index
    %42 = vector.load %arg7[%c0_14, %c0_15] : memref<1x128xbf16, #tpu.memory_space<vmem>>, vector<1x128xbf16>
    %43 = vector.broadcast %42 : vector<1x128xbf16> to vector<8x128xbf16>
    %44 = arith.addf %41, %43 : vector<8x128xbf16>
    %cst_16 = arith.constant 0.000000e+00 : bf16
    %45 = vector.broadcast %cst_16 : bf16 to vector<8x128xbf16>
    %46 = arith.maximumf %44, %45 : vector<8x128xbf16>
    %c0_17 = arith.constant 0 : index
    %c0_18 = arith.constant 0 : index
    %47 = vector.load %arg8[%c0_17, %c0_18] : memref<128x128xbf16, #tpu.memory_space<vmem>>, vector<128x128xbf16>
    %cst_19 = arith.constant dense<0.000000e+00> : vector<8x128xf32>
    %48 = tpu.matmul %46, %47, %cst_19 {dimension_numbers = #tpu.dot_dimension_numbers<[1], [0], [0], [1], [0, 0, 1, 1], [], []>} : vector<8x128xbf16>, vector<128x128xbf16>, vector<8x128xf32> -> vector<8x128xf32>
    %c0_20 = arith.constant 0 : index
    %c0_21 = arith.constant 0 : index
    %49 = vector.load %arg9[%c0_20, %c0_21] : memref<1x128xf32, #tpu.memory_space<vmem>>, vector<1x128xf32>
    %50 = vector.broadcast %49 : vector<1x128xf32> to vector<8x128xf32>
    %51 = arith.addf %48, %50 : vector<8x128xf32>
    %c0_22 = arith.constant 0 : index
    %c0_23 = arith.constant 0 : index
    %52 = vector.load %arg10[%c0_22, %c0_23] : memref<8x128xf32, #tpu.memory_space<vmem>>, vector<8x128xf32>
    tpu.vector_store %arg10[%c0_22, %c0_23], %51 {strides = array<i32>} : memref<8x128xf32, #tpu.memory_space<vmem>>, vector<8x128xf32>,
    return
  }
  func.func @transform_0(%arg0: i32) -> (i32, i32) {
    %c0_i32 = arith.constant 0 : i32
    %c0_i32_0 = arith.constant 0 : i32
    return %arg0, %c0_i32 : i32, i32
  }
  func.func @transform_1(%arg0: i32) -> (i32, i32) {
    %c0_i32 = arith.constant 0 : i32
    %c0_i32_0 = arith.constant 0 : i32
    %c0_i32_1 = arith.constant 0 : i32
    return %c0_i32, %c0_i32_0 : i32, i32
  }
  func.func @transform_2(%arg0: i32) -> (i32, i32) {
    %c0_i32 = arith.constant 0 : i32
    %c0_i32_0 = arith.constant 0 : i32
    %c0_i32_1 = arith.constant 0 : i32
    return %c0_i32, %c0_i32_0 : i32, i32
  }
  func.func @transform_3(%arg0: i32) -> (i32, i32) {
    %c0_i32 = arith.constant 0 : i32
    %c0_i32_0 = arith.constant 0 : i32
    %c0_i32_1 = arith.constant 0 : i32
    return %c0_i32, %c0_i32_0 : i32, i32
  }
  func.func @transform_4(%arg0: i32) -> (i32, i32) {
    %c0_i32 = arith.constant 0 : i32
    %c0_i32_0 = arith.constant 0 : i32
    %c0_i32_1 = arith.constant 0 : i32
    return %c0_i32, %c0_i32_0 : i32, i32
  }
  func.func @transform_5(%arg0: i32) -> (i32, i32) {
    %c0_i32 = arith.constant 0 : i32
    %c0_i32_0 = arith.constant 0 : i32
    %c0_i32_1 = arith.constant 0 : i32
    return %c0_i32, %c0_i32_0 : i32, i32
  }
  func.func @transform_6(%arg0: i32) -> (i32, i32) {
    %c0_i32 = arith.constant 0 : i32
    %c0_i32_0 = arith.constant 0 : i32
    %c0_i32_1 = arith.constant 0 : i32
    return %c0_i32, %c0_i32_0 : i32, i32
  }
  func.func @transform_7(%arg0: i32) -> (i32, i32) {
    %c0_i32 = arith.constant 0 : i32
    %c0_i32_0 = arith.constant 0 : i32
    %c0_i32_1 = arith.constant 0 : i32
    return %c0_i32, %c0_i32_0 : i32, i32
  }
  func.func @transform_8(%arg0: i32) -> (i32, i32) {
    %c0_i32 = arith.constant 0 : i32
    %c0_i32_0 = arith.constant 0 : i32
    %c0_i32_1 = arith.constant 0 : i32
    return %c0_i32, %c0_i32_0 : i32, i32
  }
  func.func @transform_9(%arg0: i32) -> (i32, i32) {
    %c0_i32 = arith.constant 0 : i32
    %c0_i32_0 = arith.constant 0 : i32
    return %arg0, %c0_i32 : i32, i32
  }
}

module attributes {stable_mosaic.version = 11 : i64} {
  func.func @_mlp_kernel(%arg0: i32, %arg1: memref<8x4xf32, #tpu.memory_space<vmem>>, %arg2: memref<4x256xf32, #tpu.memory_space<vmem>>, %arg3: memref<1x256xf32, #tpu.memory_space<vmem>>, %arg4: memref<256x256xbf16, #tpu.memory_space<vmem>>, %arg5: memref<1x256xbf16, #tpu.memory_space<vmem>>, %arg6: memref<256x128xbf16, #tpu.memory_space<vmem>>, %arg7: memref<1x128xbf16, #tpu.memory_space<vmem>>, %arg8: memref<128x128xbf16, #tpu.memory_space<vmem>>, %arg9: memref<1x128xf32, #tpu.memory_space<vmem>>, %arg10: memref<8x128xf32, #tpu.memory_space<vmem>>) attributes {dimension_semantics = [#tpu.dimension_semantics<parallel>], iteration_bounds = array<i64: 1>, scalar_prefetch = 0 : i64, scratch_operands = 0 : i64, tpu.core_type = #tpu.core_type<tc>, window_params = [{transform_indices = @transform_0, window_bounds = array<i64: 8, 4>}, {pipeline_mode = #tpu.pipeline_mode<synchronous>, transform_indices = @transform_1, window_bounds = array<i64: 4, 256>}, {pipeline_mode = #tpu.pipeline_mode<synchronous>, transform_indices = @transform_2, window_bounds = array<i64: 1, 256>}, {pipeline_mode = #tpu.pipeline_mode<synchronous>, transform_indices = @transform_3, window_bounds = array<i64: 256, 256>}, {pipeline_mode = #tpu.pipeline_mode<synchronous>, transform_indices = @transform_4, window_bounds = array<i64: 1, 256>}, {pipeline_mode = #tpu.pipeline_mode<synchronous>, transform_indices = @transform_5, window_bounds = array<i64: 256, 128>}, {pipeline_mode = #tpu.pipeline_mode<synchronous>, transform_indices = @transform_6, window_bounds = array<i64: 1, 128>}, {pipeline_mode = #tpu.pipeline_mode<synchronous>, transform_indices = @transform_7, window_bounds = array<i64: 128, 128>}, {pipeline_mode = #tpu.pipeline_mode<synchronous>, transform_indices = @transform_8, window_bounds = array<i64: 1, 128>}, {transform_indices = @transform_9, window_bounds = array<i64: 8, 128>}]} {
    %c0 = arith.constant 0 : index
    %c0_0 = arith.constant 0 : index
    %0 = vector.load %arg1[%c0, %c0_0] : memref<8x4xf32, #tpu.memory_space<vmem>>, vector<8x4xf32>
    %c0_1 = arith.constant 0 : index
    %c0_2 = arith.constant 0 : index
    %1 = vector.load %arg2[%c0_1, %c0_2] : memref<4x256xf32, #tpu.memory_space<vmem>>, vector<4x256xf32>
    %2 = vector.extract_strided_slice %0 {offsets = [0, 0], sizes = [8, 1], strides = [1, 1]} : vector<8x4xf32> to vector<8x1xf32>
    %3 = vector.extract_strided_slice %1 {offsets = [0, 0], sizes = [1, 256], strides = [1, 1]} : vector<4x256xf32> to vector<1x256xf32>
    %4 = vector.broadcast %2 : vector<8x1xf32> to vector<8x256xf32>
    %5 = vector.broadcast %3 : vector<1x256xf32> to vector<8x256xf32>
    %6 = arith.mulf %4, %5 : vector<8x256xf32>
    %7 = vector.extract_strided_slice %0 {offsets = [0, 1], sizes = [8, 1], strides = [1, 1]} : vector<8x4xf32> to vector<8x1xf32>
    %8 = vector.extract_strided_slice %1 {offsets = [1, 0], sizes = [1, 256], strides = [1, 1]} : vector<4x256xf32> to vector<1x256xf32>
    %9 = vector.broadcast %7 : vector<8x1xf32> to vector<8x256xf32>
    %10 = vector.broadcast %8 : vector<1x256xf32> to vector<8x256xf32>
    %11 = arith.mulf %9, %10 : vector<8x256xf32>
    %12 = arith.addf %6, %11 : vector<8x256xf32>
    %13 = vector.extract_strided_slice %0 {offsets = [0, 2], sizes = [8, 1], strides = [1, 1]} : vector<8x4xf32> to vector<8x1xf32>
    %14 = vector.extract_strided_slice %1 {offsets = [2, 0], sizes = [1, 256], strides = [1, 1]} : vector<4x256xf32> to vector<1x256xf32>
    %15 = vector.broadcast %13 : vector<8x1xf32> to vector<8x256xf32>
    %16 = vector.broadcast %14 : vector<1x256xf32> to vector<8x256xf32>
    %17 = arith.mulf %15, %16 : vector<8x256xf32>
    %18 = arith.addf %12, %17 : vector<8x256xf32>
    %19 = vector.extract_strided_slice %0 {offsets = [0, 3], sizes = [8, 1], strides = [1, 1]} : vector<8x4xf32> to vector<8x1xf32>
    %20 = vector.extract_strided_slice %1 {offsets = [3, 0], sizes = [1, 256], strides = [1, 1]} : vector<4x256xf32> to vector<1x256xf32>
    %21 = vector.broadcast %19 : vector<8x1xf32> to vector<8x256xf32>
    %22 = vector.broadcast %20 : vector<1x256xf32> to vector<8x256xf32>
    %23 = arith.mulf %21, %22 : vector<8x256xf32>
    %24 = arith.addf %18, %23 : vector<8x256xf32>
    %c0_3 = arith.constant 0 : index
    %c0_4 = arith.constant 0 : index
    %25 = vector.load %arg3[%c0_3, %c0_4] : memref<1x256xf32, #tpu.memory_space<vmem>>, vector<1x256xf32>
    %26 = vector.broadcast %25 : vector<1x256xf32> to vector<8x256xf32>
    %27 = arith.addf %24, %26 : vector<8x256xf32>
    %cst = arith.constant 0.000000e+00 : f32
    %28 = vector.broadcast %cst : f32 to vector<8x256xf32>
    %29 = arith.maximumf %27, %28 : vector<8x256xf32>
    %30 = arith.truncf %29 : vector<8x256xf32> to vector<8x256xbf16>
    %c0_5 = arith.constant 0 : index
    %c0_6 = arith.constant 0 : index
    %31 = vector.load %arg4[%c0_5, %c0_6] : memref<256x256xbf16, #tpu.memory_space<vmem>>, vector<256x256xbf16>
    %cst_7 = arith.constant dense<0.000000e+00> : vector<8x256xf32>
    %32 = tpu.matmul %30, %31, %cst_7 {dimension_numbers = #tpu.dot_dimension_numbers<[1], [0], [0], [1], [0, 0, 1, 1], [], []>} : vector<8x256xbf16>, vector<256x256xbf16>, vector<8x256xf32> -> vector<8x256xf32>
    %33 = arith.truncf %32 : vector<8x256xf32> to vector<8x256xbf16>
    %c0_8 = arith.constant 0 : index
    %c0_9 = arith.constant 0 : index
    %34 = vector.load %arg5[%c0_8, %c0_9] : memref<1x256xbf16, #tpu.memory_space<vmem>>, vector<1x256xbf16>
    %35 = vector.broadcast %34 : vector<1x256xbf16> to vector<8x256xbf16>
    %36 = arith.addf %33, %35 : vector<8x256xbf16>
    %cst_10 = arith.constant 0.000000e+00 : bf16
    %37 = vector.broadcast %cst_10 : bf16 to vector<8x256xbf16>
    %38 = arith.maximumf %36, %37 : vector<8x256xbf16>
    %c0_11 = arith.constant 0 : index
    %c0_12 = arith.constant 0 : index
    %39 = vector.load %arg6[%c0_11, %c0_12] : memref<256x128xbf16, #tpu.memory_space<vmem>>, vector<256x128xbf16>
    %cst_13 = arith.constant dense<0.000000e+00> : vector<8x128xf32>
    %40 = tpu.matmul %38, %39, %cst_13 {dimension_numbers = #tpu.dot_dimension_numbers<[1], [0], [0], [1], [0, 0, 1, 1], [], []>} : vector<8x256xbf16>, vector<256x128xbf16>, vector<8x128xf32> -> vector<8x128xf32>
    %41 = arith.truncf %40 : vector<8x128xf32> to vector<8x128xbf16>
    %c0_14 = arith.constant 0 : index
    %c0_15 = arith.constant 0 : index
    %42 = vector.load %arg7[%c0_14, %c0_15] : memref<1x128xbf16, #tpu.memory_space<vmem>>, vector<1x128xbf16>
    %43 = vector.broadcast %42 : vector<1x128xbf16> to vector<8x128xbf16>
    %44 = arith.addf %41, %43 : vector<8x128xbf16>
    %cst_16 = arith.constant 0.000000e+00 : bf16
    %45 = vector.broadcast %cst_16 : bf16 to vector<8x128xbf16>
    %46 = arith.maximumf %44, %45 : vector<8x128xbf16>
    %c0_17 = arith.constant 0 : index
    %c0_18 = arith.constant 0 : index
    %47 = vector.load %arg8[%c0_17, %c0_18] : memref<128x128xbf16, #tpu.memory_space<vmem>>, vector<128x128xbf16>
    %cst_19 = arith.constant dense<0.000000e+00> : vector<8x128xf32>
    %48 = tpu.matmul %46, %47, %cst_19 {dimension_numbers = #tpu.dot_dimension_numbers<[1], [0], [0], [1], [0, 0, 1, 1], [], []>} : vector<8x128xbf16>, vector<128x128xbf16>, vector<8x128xf32> -> vector<8x128xf32>
    %c0_20 = arith.constant 0 : index
    %c0_21 = arith.constant 0 : index
    %49 = vector.load %arg9[%c0_20, %c0_21] : memref<1x128xf32, #tpu.memory_space<vmem>>, vector<1x128xf32>
    %50 = vector.broadcast %49 : vector<1x128xf32> to vector<8x128xf32>
    %51 = arith.addf %48, %50 : vector<8x128xf32>
    %c0_22 = arith.constant 0 : index
    %c0_23 = arith.constant 0 : index
    %52 = vector.load %arg10[%c0_22, %c0_23] : memref<8x128xf32, #tpu.memory_space<vmem>>, vector<8x128xf32>
    tpu.vector_store %arg10[%c0_22, %c0_23], %51 {strides = array<i32>} : memref<8x128xf32, #tpu.memory_space<vmem>>, vector<8x128xf32>,
    return
  }
  func.func @transform_0(%arg0: i32) -> (i32, i32) {
    %c0_i32 = arith.constant 0 : i32
    %c0_i32_0 = arith.constant 0 : i32
    return %arg0, %c0_i32 : i32, i32
  }
  func.func @transform_1(%arg0: i32) -> (i32, i32) {
    %c0_i32 = arith.constant 0 : i32
    %c0_i32_0 = arith.constant 0 : i32
    %c0_i32_1 = arith.constant 0 : i32
    return %c0_i32, %c0_i32_0 : i32, i32
  }
  func.func @transform_2(%arg0: i32) -> (i32, i32) {
    %c0_i32 = arith.constant 0 : i32
    %c0_i32_0 = arith.constant 0 : i32
    %c0_i32_1 = arith.constant 0 : i32
    return %c0_i32, %c0_i32_0 : i32, i32
  }
  func.func @transform_3(%arg0: i32) -> (i32, i32) {
    %c0_i32 = arith.constant 0 : i32
    %c0_i32_0 = arith.constant 0 : i32
    %c0_i32_1 = arith.constant 0 : i32
    return %c0_i32, %c0_i32_0 : i32, i32
  }
  func.func @transform_4(%arg0: i32) -> (i32, i32) {
    %c0_i32 = arith.constant 0 : i32
    %c0_i32_0 = arith.constant 0 : i32
    %c0_i32_1 = arith.constant 0 : i32
    return %c0_i32, %c0_i32_0 : i32, i32
  }
  func.func @transform_5(%arg0: i32) -> (i32, i32) {
    %c0_i32 = arith.constant 0 : i32
    %c0_i32_0 = arith.constant 0 : i32
    %c0_i32_1 = arith.constant 0 : i32
    return %c0_i32, %c0_i32_0 : i32, i32
  }
  func.func @transform_6(%arg0: i32) -> (i32, i32) {
    %c0_i32 = arith.constant 0 : i32
    %c0_i32_0 = arith.constant 0 : i32
    %c0_i32_1 = arith.constant 0 : i32
    return %c0_i32, %c0_i32_0 : i32, i32
  }
  func.func @transform_7(%arg0: i32) -> (i32, i32) {
    %c0_i32 = arith.constant 0 : i32
    %c0_i32_0 = arith.constant 0 : i32
    %c0_i32_1 = arith.constant 0 : i32
    return %c0_i32, %c0_i32_0 : i32, i32
  }
  func.func @transform_8(%arg0: i32) -> (i32, i32) {
    %c0_i32 = arith.constant 0 : i32
    %c0_i32_0 = arith.constant 0 : i32
    %c0_i32_1 = arith.constant 0 : i32
    return %c0_i32, %c0_i32_0 : i32, i32
  }
  func.func @transform_9(%arg0: i32) -> (i32, i32) {
    %c0_i32 = arith.constant 0 : i32
    %c0_i32_0 = arith.constant 0 : i32
    return %arg0, %c0_i32 : i32, i32
  }
}

</mosaic_0001>

<llo_original>
// kernel: tpu_custom_call.1
$region0: #{tpu_custom_call.1}
  #allocation0 [shape = 'u32[]', space=smem, size = 0x4, offset = 0x4, fixed_abs, tag = 'smem constant byte address 0x4 - core index']
  #allocation1 [shape = 'u32[144,128]{1,0:T(1,128)}', space=vmem, size = 0x12000, scoped, tag = 'internal scratch']
  %s0 = inlined_call_operand.vmem [shape: f32[8,4], index: 0, kind: input, shape index: {}]
  %s1 = inlined_call_operand.vmem [shape: f32[4,256], index: 1, kind: input, shape index: {}]
  %s2 = inlined_call_operand.vmem [shape: f32[1,256], index: 2, kind: input, shape index: {}]
  %s3 = inlined_call_operand.hbm [shape: bf16[256,256], index: 3, kind: input, shape index: {}]
  %s4 = inlined_call_operand.vmem [shape: bf16[1,256], index: 4, kind: input, shape index: {}]
  %s5 = inlined_call_operand.hbm [shape: bf16[256,128], index: 5, kind: input, shape index: {}]
  %s6 = inlined_call_operand.vmem [shape: bf16[1,128], index: 6, kind: input, shape index: {}]
  %s7 = inlined_call_operand.hbm [shape: bf16[128,128], index: 7, kind: input, shape index: {}]
  %s8 = inlined_call_operand.vmem [shape: f32[1,128], index: 8, kind: input, shape index: {}]
  %s9 = inlined_call_operand.hbm [shape: f32[8,128], index: 9, kind: output, shape index: {}]
  %s10 = sld [smem:[#allocation0]]
  $region58: #{tpu_custom_call.1} parent=0
    _
  %s12 = ssub.s32 1, %s10
  %s13 = scalar_select 0, %s12, %s10
  $region1: #{tpu_custom_call.1} parent=0
    #allocation2 [shape = 'u8[131072]{0}', space=vmem, size = 0x20000, scoped, tag = 'input window, operand 3, single buffered']
    #allocation3 [shape = 's32[1]{0}', space=sflag, size = 0x4, scoped, tag = 'scoped memory for tpu_custom_call.1']
    #allocation4 [shape = 's32[1]{0}', space=sflag, size = 0x4, scoped, tag = 'scoped memory for tpu_custom_call.1']
    #allocation5 [shape = 'u8[65536]{0}', space=vmem, size = 0x10000, scoped, tag = 'input window, operand 5, single buffered']
    #allocation6 [shape = 's32[1]{0}', space=sflag, size = 0x4, scoped, tag = 'scoped memory for tpu_custom_call.1']
    #allocation7 [shape = 'u8[32768]{0}', space=vmem, size = 0x8000, scoped, tag = 'input window, operand 7, single buffered']
    #allocation8 [shape = 'u8[4096]{0}', space=vmem, size = 0x1000, scoped, tag = 'output window, operand 0, single buffered']
    %14 = vsyncpa [#allocation3], 0
    %15 = vsyncpa [#allocation6], 0
    %16 = vsyncpa [#allocation4], 0
    // Predicated region
    $region2: #{tpu_custom_call.1} parent=1 // pred_check
      _
    $region3: #{tpu_custom_call.1} parent=1 // pred_check_branch
      %18 = sbr.rel (0) target = $region5
    $region4: #{tpu_custom_call.1} parent=1 // pred_region
      _
    $region5: #{tpu_custom_call.1} parent=1 // pred_fallthru
      _
    // Predicated region
    $region6: #{tpu_custom_call.1} parent=1 // pred_check
      _
    $region7: #{tpu_custom_call.1} parent=1 // pred_check_branch
      %20 = sbr.rel (0) target = $region9
    $region8: #{tpu_custom_call.1} parent=1 // pred_region
      _
    $region9: #{tpu_custom_call.1} parent=1 // pred_fallthru
      _
    // Predicated region
    $region10: #{tpu_custom_call.1} parent=1 // pred_check
      _
    $region11: #{tpu_custom_call.1} parent=1 // pred_check_branch
      %22 = sbr.rel (0) target = $region13
    $region12: #{tpu_custom_call.1} parent=1 // pred_region
      _
    $region13: #{tpu_custom_call.1} parent=1 // pred_fallthru
      _
    // Predicated region
    $region14: #{tpu_custom_call.1} parent=1 // pred_check
      _
    $region15: #{tpu_custom_call.1} parent=1 // pred_check_branch
      %24 = sbr.rel (0) target = $region17
    $region16: #{tpu_custom_call.1} parent=1 // pred_region
      %s26 = ssub.s32 4096, 4096
      %27 = vsyncadd [#allocation3], %s26
      %s28 = sshll.u32 [#allocation2], 4
      %s29 = int_to_ptr.vmem [resolvable:$true] %s28
      %34 = dma.hbm_to_vmem [thread:$0]  %s3, 4096, %s29, [#allocation3], 128, 128, 8
    $region17: #{tpu_custom_call.1} parent=1 // pred_fallthru
      _
    // Predicated region
    $region18: #{tpu_custom_call.1} parent=1 // pred_check
      _
    $region19: #{tpu_custom_call.1} parent=1 // pred_check_branch
      %36 = sbr.rel (0) target = $region21
    $region20: #{tpu_custom_call.1} parent=1 // pred_region
      _
    $region21: #{tpu_custom_call.1} parent=1 // pred_fallthru
      _
    // Predicated region
    $region22: #{tpu_custom_call.1} parent=1 // pred_check
      _
    $region23: #{tpu_custom_call.1} parent=1 // pred_check_branch
      %38 = sbr.rel (0) target = $region25
    $region24: #{tpu_custom_call.1} parent=1 // pred_region
      %s40 = ssub.s32 2048, 2048
      %41 = vsyncadd [#allocation6], %s40
      %s42 = sshll.u32 [#allocation5], 4
      %s43 = int_to_ptr.vmem [resolvable:$true] %s42
      %48 = dma.hbm_to_vmem [thread:$0]  %s5, 2048, %s43, [#allocation6], 64, 64, 4
    $region25: #{tpu_custom_call.1} parent=1 // pred_fallthru
      _
    // Predicated region
    $region26: #{tpu_custom_call.1} parent=1 // pred_check
      _
    $region27: #{tpu_custom_call.1} parent=1 // pred_check_branch
      %50 = sbr.rel (0) target = $region29
    $region28: #{tpu_custom_call.1} parent=1 // pred_region
      _
    $region29: #{tpu_custom_call.1} parent=1 // pred_fallthru
      _
    // Predicated region
    $region30: #{tpu_custom_call.1} parent=1 // pred_check
      _
    $region31: #{tpu_custom_call.1} parent=1 // pred_check_branch
      %52 = sbr.rel (0) target = $region33
    $region32: #{tpu_custom_call.1} parent=1 // pred_region
      %s54 = ssub.s32 1024, 1024
      %55 = vsyncadd [#allocation6], %s54
      %s56 = sshll.u32 [#allocation7], 4
      %s57 = int_to_ptr.vmem [resolvable:$true] %s56
      %62 = dma.hbm_to_vmem [thread:$0]  %s7, 1024, %s57, [#allocation6], 64, 64, 4
    $region33: #{tpu_custom_call.1} parent=1 // pred_fallthru
      _
    // Predicated region
    $region34: #{tpu_custom_call.1} parent=1 // pred_check
      _
    $region35: #{tpu_custom_call.1} parent=1 // pred_check_branch
      %64 = sbr.rel (0) target = $region37
    $region36: #{tpu_custom_call.1} parent=1 // pred_region
      _
    $region37: #{tpu_custom_call.1} parent=1 // pred_fallthru
      _
    // Predicated region
    $region38: #{tpu_custom_call.1} parent=1 // pred_check
      _
    $region39: #{tpu_custom_call.1} parent=1 // pred_check_branch
      %66 = sbr.rel (0) target = $region41
    $region40: #{tpu_custom_call.1} parent=1 // pred_region
      %67 = dma.done [#allocation3], 4096
    $region41: #{tpu_custom_call.1} parent=1 // pred_fallthru
      _
    // Predicated region
    $region42: #{tpu_custom_call.1} parent=1 // pred_check
      _
    $region43: #{tpu_custom_call.1} parent=1 // pred_check_branch
      %69 = sbr.rel (0) target = $region45
    $region44: #{tpu_custom_call.1} parent=1 // pred_region
      %70 = dma.done [#allocation6], 2048
    $region45: #{tpu_custom_call.1} parent=1 // pred_fallthru
      _
    // Predicated region
    $region46: #{tpu_custom_call.1} parent=1 // pred_check
      _
    $region47: #{tpu_custom_call.1} parent=1 // pred_check_branch
      %72 = sbr.rel (0) target = $region49
    $region48: #{tpu_custom_call.1} parent=1 // pred_region
      %73 = dma.done [#allocation6], 1024
    $region49: #{tpu_custom_call.1} parent=1 // pred_fallthru
      _
    %v75 = vld [vmem:[%s0] sm:$0xff]
    %v76 = vld [vmem:[%s1] sm:$0xff]
    %78 = vset.pattern.permute.xlu0 0
    %79 = vperm.xlu0 %78, %v75
    %v80 = vpop.permute.xlu0 %79
    %v83 = vlaneseq
    %v84 = vshrl.u32 %v83, 7
    %v85 = vsub.s32 0, %v84
    %v86 = vrot.slane %v76, %v85
    %v87 = vlaneseq
    %v88 = vshrl.u32 %v87, 7
    %v89 = vsub.s32 4, %v88
    %v90 = vrot.slane %v76, %v89
    %v93 = vlaneseq
    %v94 = vshrl.u32 %v93, 7
    %v95 = vsub.s32 0, %v94
    %v96 = vrot.slane %v86, %v95
    %v97 = vlaneseq
    %v98 = vshrl.u32 %v97, 7
    %v99 = vsub.s32 0, %v98
    %v100 = vrot.slane %v90, %v99
    %v101 = vmul.f32 %v80, %v96
    %v102 = vmul.f32 %v80, %v100
    %103 = vset.pattern.permute.xlu0 1
    %104 = vperm.xlu0 %103, %v75
    %v105 = vpop.permute.xlu0 %104
    %v107 = vlaneseq
    %v108 = vshrl.u32 %v107, 7
    %v109 = vsub.s32 1, %v108
    %v110 = vrot.slane %v76, %v109
    %v111 = vlaneseq
    %v112 = vshrl.u32 %v111, 7
    %v113 = vsub.s32 5, %v112
    %v114 = vrot.slane %v76, %v113
    %v117 = vlaneseq
    %v118 = vshrl.u32 %v117, 7
    %v119 = vsub.s32 1, %v118
    %v120 = vrot.slane %v110, %v119
    %v121 = vlaneseq
    %v122 = vshrl.u32 %v121, 7
    %v123 = vsub.s32 1, %v122
    %v124 = vrot.slane %v114, %v123
    %v125 = vmul.f32 %v105, %v120
    %v126 = vmul.f32 %v105, %v124
    %v127 = vadd.f32 %v101, %v125
    %v128 = vadd.f32 %v102, %v126
    %129 = vset.pattern.permute.xlu0 2
    %130 = vperm.xlu0 %129, %v75
    %v131 = vpop.permute.xlu0 %130
    %v133 = vlaneseq
    %v134 = vshrl.u32 %v133, 7
    %v135 = vsub.s32 2, %v134
    %v136 = vrot.slane %v76, %v135
    %v137 = vlaneseq
    %v138 = vshrl.u32 %v137, 7
    %v139 = vsub.s32 6, %v138
    %v140 = vrot.slane %v76, %v139
    %v143 = vlaneseq
    %v144 = vshrl.u32 %v143, 7
    %v145 = vsub.s32 2, %v144
    %v146 = vrot.slane %v136, %v145
    %v147 = vlaneseq
    %v148 = vshrl.u32 %v147, 7
    %v149 = vsub.s32 2, %v148
    %v150 = vrot.slane %v140, %v149
    %v151 = vmul.f32 %v131, %v146
    %v152 = vmul.f32 %v131, %v150
    %v153 = vadd.f32 %v127, %v151
    %v154 = vadd.f32 %v128, %v152
    %155 = vset.pattern.permute.xlu0 3
    %156 = vperm.xlu0 %155, %v75
    %v157 = vpop.permute.xlu0 %156
    %v159 = vlaneseq
    %v160 = vshrl.u32 %v159, 7
    %v161 = vsub.s32 3, %v160
    %v162 = vrot.slane %v76, %v161
    %v163 = vlaneseq
    %v164 = vshrl.u32 %v163, 7
    %v165 = vsub.s32 7, %v164
    %v166 = vrot.slane %v76, %v165
    %v169 = vlaneseq
    %v170 = vshrl.u32 %v169, 7
    %v171 = vsub.s32 3, %v170
    %v172 = vrot.slane %v162, %v171
    %v173 = vlaneseq
    %v174 = vshrl.u32 %v173, 7
    %v175 = vsub.s32 3, %v174
    %v176 = vrot.slane %v166, %v175
    %v177 = vmul.f32 %v157, %v172
    %v178 = vmul.f32 %v157, %v176
    %v179 = vadd.f32 %v153, %v177
    %v180 = vadd.f32 %v154, %v178
    %v181 = vld [vmem:[%s2] sm:$0x3]
    %v183 = vlaneseq
    %v184 = vshrl.u32 %v183, 7
    %v185 = vsub.s32 0, %v184
    %v186 = vrot.slane %v181, %v185
    %v187 = vlaneseq
    %v188 = vshrl.u32 %v187, 7
    %v189 = vsub.s32 1, %v188
    %v190 = vrot.slane %v181, %v189
    %v193 = vadd.f32 %v179, %v186
    %v194 = vadd.f32 %v180, %v190
    %v195 = vmax.f32 %v193, 0.0
    %v196 = vmax.f32 %v194, 0.0
    %v197 = vpack.c.bf16 %v195, %v195
    %v198 = vpack.c.bf16 %v196, %v196
    %v199 = vld [vmem:[#allocation2] sm:$0xff]
    %v200 = vld [vmem:[#allocation2 + $0x8] sm:$0xff]
    %v201 = vld [vmem:[#allocation2 + $0x10] sm:$0xff]
    %v202 = vld [vmem:[#allocation2 + $0x18] sm:$0xff]
    %v203 = vld [vmem:[#allocation2 + $0x20] sm:$0xff]
    %v204 = vld [vmem:[#allocation2 + $0x28] sm:$0xff]
    %v205 = vld [vmem:[#allocation2 + $0x30] sm:$0xff]
    %v206 = vld [vmem:[#allocation2 + $0x38] sm:$0xff]
    %v207 = vld [vmem:[#allocation2 + $0x40] sm:$0xff]
    %v208 = vld [vmem:[#allocation2 + $0x48] sm:$0xff]
    %v209 = vld [vmem:[#allocation2 + $0x50] sm:$0xff]
    %v210 = vld [vmem:[#allocation2 + $0x58] sm:$0xff]
    %v211 = vld [vmem:[#allocation2 + $0x60] sm:$0xff]
    %v212 = vld [vmem:[#allocation2 + $0x68] sm:$0xff]
    %v213 = vld [vmem:[#allocation2 + $0x70] sm:$0xff]
    %v214 = vld [vmem:[#allocation2 + $0x78] sm:$0xff]
    %v215 = vld [vmem:[#allocation2 + $0x80] sm:$0xff]
    %v216 = vld [vmem:[#allocation2 + $0x88] sm:$0xff]
    %v217 = vld [vmem:[#allocation2 + $0x90] sm:$0xff]
    %v218 = vld [vmem:[#allocation2 + $0x98] sm:$0xff]
    %v219 = vld [vmem:[#allocation2 + $0xa0] sm:$0xff]
    %v220 = vld [vmem:[#allocation2 + $0xa8] sm:$0xff]
    %v221 = vld [vmem:[#allocation2 + $0xb0] sm:$0xff]
    %v222 = vld [vmem:[#allocation2 + $0xb8] sm:$0xff]
    %v223 = vld [vmem:[#allocation2 + $0xc0] sm:$0xff]
    %v224 = vld [vmem:[#allocation2 + $0xc8] sm:$0xff]
    %v225 = vld [vmem:[#allocation2 + $0xd0] sm:$0xff]
    %v226 = vld [vmem:[#allocation2 + $0xd8] sm:$0xff]
    %v227 = vld [vmem:[#allocation2 + $0xe0] sm:$0xff]
    %v228 = vld [vmem:[#allocation2 + $0xe8] sm:$0xff]
    %v229 = vld [vmem:[#allocation2 + $0xf0] sm:$0xff]
    %v230 = vld [vmem:[#allocation2 + $0xf8] sm:$0xff]
    %v263 = vunpack.c.l.b16 %v199
    %v264 = vunpack.c.h.b16 %v199
    %v265 = vunpack.c.l.b16 %v200
    %v266 = vunpack.c.h.b16 %v200
    %v267 = vunpack.c.l.b16 %v201
    %v268 = vunpack.c.h.b16 %v201
    %v269 = vunpack.c.l.b16 %v202
    %v270 = vunpack.c.h.b16 %v202
    %v271 = vunpack.c.l.b16 %v203
    %v272 = vunpack.c.h.b16 %v203
    %v273 = vunpack.c.l.b16 %v204
    %v274 = vunpack.c.h.b16 %v204
    %v275 = vunpack.c.l.b16 %v205
    %v276 = vunpack.c.h.b16 %v205
    %v277 = vunpack.c.l.b16 %v206
    %v278 = vunpack.c.h.b16 %v206
    %v279 = vunpack.c.l.b16 %v207
    %v280 = vunpack.c.h.b16 %v207
    %v281 = vunpack.c.l.b16 %v208
    %v282 = vunpack.c.h.b16 %v208
    %v283 = vunpack.c.l.b16 %v209
    %v284 = vunpack.c.h.b16 %v209
    %v285 = vunpack.c.l.b16 %v210
    %v286 = vunpack.c.h.b16 %v210
    %v287 = vunpack.c.l.b16 %v211
    %v288 = vunpack.c.h.b16 %v211
    %v289 = vunpack.c.l.b16 %v212
    %v290 = vunpack.c.h.b16 %v212
    %v291 = vunpack.c.l.b16 %v213
    %v292 = vunpack.c.h.b16 %v213
    %v293 = vunpack.c.l.b16 %v214
    %v294 = vunpack.c.h.b16 %v214
    %v295 = vunpack.c.l.b16 %v215
    %v296 = vunpack.c.h.b16 %v215
    %v297 = vunpack.c.l.b16 %v216
    %v298 = vunpack.c.h.b16 %v216
    %v299 = vunpack.c.l.b16 %v217
    %v300 = vunpack.c.h.b16 %v217
    %v301 = vunpack.c.l.b16 %v218
    %v302 = vunpack.c.h.b16 %v218
    %v303 = vunpack.c.l.b16 %v219
    %v304 = vunpack.c.h.b16 %v219
    %v305 = vunpack.c.l.b16 %v220
    %v306 = vunpack.c.h.b16 %v220
    %v307 = vunpack.c.l.b16 %v221
    %v308 = vunpack.c.h.b16 %v221
    %v309 = vunpack.c.l.b16 %v222
    %v310 = vunpack.c.h.b16 %v222
    %v311 = vunpack.c.l.b16 %v223
    %v312 = vunpack.c.h.b16 %v223
    %v313 = vunpack.c.l.b16 %v224
    %v314 = vunpack.c.h.b16 %v224
    %v315 = vunpack.c.l.b16 %v225
    %v316 = vunpack.c.h.b16 %v225
    %v317 = vunpack.c.l.b16 %v226
    %v318 = vunpack.c.h.b16 %v226
    %v319 = vunpack.c.l.b16 %v227
    %v320 = vunpack.c.h.b16 %v227
    %v321 = vunpack.c.l.b16 %v228
    %v322 = vunpack.c.h.b16 %v228
    %v323 = vunpack.c.l.b16 %v229
    %v324 = vunpack.c.h.b16 %v229
    %v325 = vunpack.c.l.b16 %v230
    %v326 = vunpack.c.h.b16 %v230
    %v327 = vpack.c.b16 %v265, %v263
    %v328 = vpack.c.b16 %v266, %v264
    %v329 = vpack.c.b16 %v269, %v267
    %v330 = vpack.c.b16 %v270, %v268
    %v331 = vpack.c.b16 %v273, %v271
    %v332 = vpack.c.b16 %v274, %v272
    %v333 = vpack.c.b16 %v277, %v275
    %v334 = vpack.c.b16 %v278, %v276
    %v335 = vpack.c.b16 %v281, %v279
    %v336 = vpack.c.b16 %v282, %v280
    %v337 = vpack.c.b16 %v285, %v283
    %v338 = vpack.c.b16 %v286, %v284
    %v339 = vpack.c.b16 %v289, %v287
    %v340 = vpack.c.b16 %v290, %v288
    %v341 = vpack.c.b16 %v293, %v291
    %v342 = vpack.c.b16 %v294, %v292
    %v343 = vpack.c.b16 %v297, %v295
    %v344 = vpack.c.b16 %v298, %v296
    %v345 = vpack.c.b16 %v301, %v299
    %v346 = vpack.c.b16 %v302, %v300
    %v347 = vpack.c.b16 %v305, %v303
    %v348 = vpack.c.b16 %v306, %v304
    %v349 = vpack.c.b16 %v309, %v307
    %v350 = vpack.c.b16 %v310, %v308
    %v351 = vpack.c.b16 %v313, %v311
    %v352 = vpack.c.b16 %v314, %v312
    %v353 = vpack.c.b16 %v317, %v315
    %v354 = vpack.c.b16 %v318, %v316
    %v355 = vpack.c.b16 %v321, %v319
    %v356 = vpack.c.b16 %v322, %v320
    %v357 = vpack.c.b16 %v325, %v323
    %v358 = vpack.c.b16 %v326, %v324
    %391 = vmatprep.subr.bf16.mxu0 %v328
    %392 = vmatpush1.bf16.msra.mxu0 %v327
    %393 = vmatprep.subr.bf16.mxu0 %v330
    %394 = vmatpush1.bf16.msra.mxu0 %v329
    %395 = vmatprep.subr.bf16.mxu0 %v332
    %396 = vmatpush1.bf16.msra.mxu0 %v331
    %397 = vmatprep.subr.bf16.mxu0 %v334
    %398 = vmatpush1.bf16.msra.mxu0 %v333
    %399 = vmatprep.subr.bf16.mxu0 %v336
    %400 = vmatpush1.bf16.msra.mxu0 %v335
    %401 = vmatprep.subr.bf16.mxu0 %v338
    %402 = vmatpush1.bf16.msra.mxu0 %v337
    %403 = vmatprep.subr.bf16.mxu0 %v340
    %404 = vmatpush1.bf16.msra.mxu0 %v339
    %405 = vmatprep.subr.bf16.mxu0 %v342
    %406 = vmatpush1.bf16.msra.mxu0 %v341
    %407 = vmatprep.subr.bf16.mxu0 %v344
    %408 = vmatpush1.bf16.msra.mxu0 %v343
    %409 = vmatprep.subr.bf16.mxu0 %v346
    %410 = vmatpush1.bf16.msra.mxu0 %v345
    %411 = vmatprep.subr.bf16.mxu0 %v348
    %412 = vmatpush1.bf16.msra.mxu0 %v347
    %413 = vmatprep.subr.bf16.mxu0 %v350
    %414 = vmatpush1.bf16.msra.mxu0 %v349
    %415 = vmatprep.subr.bf16.mxu0 %v352
    %416 = vmatpush1.bf16.msra.mxu0 %v351
    %417 = vmatprep.subr.bf16.mxu0 %v354
    %418 = vmatpush1.bf16.msra.mxu0 %v353
    %419 = vmatprep.subr.bf16.mxu0 %v356
    %420 = vmatpush1.bf16.msra.mxu0 %v355
    %421 = vmatprep.subr.bf16.mxu0 %v358
    %422 = vmatpush1.bf16.msra.mxu0 %v357
    %423 = vmatprep.mubr.bf16.mxu0 %v198
    %424 = vmatmul.mubr.bf16.gmra.mrb[0].mxu0 %v197
    %v425 = vpop.f32.mrb[0].mxu0
    %v426 = vadd.f32 0.0, %v425
    %v427 = vpop.f32.mrb[0].mxu0
    %v428 = vadd.f32 0.0, %v427
    %v429 = vpop.f32.mrb[0].mxu0
    %v430 = vpop.f32.mrb[0].mxu0
    %431 = vdwg.mxu0
    %v432 = vpack.c.bf16 %v426, %v426
    %v433 = vpack.c.bf16 %v428, %v428
    %v434 = vld [vmem:[%s4] sm:$0x3]
    %v437 = vunpack.c.l.s4 1966171168
    %v438 = vunpack.c.0.s8 %v437
    %v439 = vlaneseq
    %v440 = vshrl.u32 %v439, 7
    %v441 = vsub.s32 %v438, %v440
    %v442 = vrot.slane %v434, %v441
    %v443 = vcombine.high %v442, %v442
    %v445 = vunpack.c.l.s4 1966171168
    %v446 = vunpack.c.0.s8 %v445
    %v447 = vlaneseq
    %v448 = vshrl.u32 %v447, 7
    %v449 = vsub.s32 %v446, %v448
    %v450 = vrot.slane %v442, %v449
    %v452 = vunpack.c.l.s4 1966171168
    %v453 = vunpack.c.0.s8 %v452
    %v454 = vlaneseq
    %v455 = vshrl.u32 %v454, 7
    %v456 = vsub.s32 %v453, %v455
    %v457 = vrot.slane %v443, %v456
    %v459 = vpack.i.b16 %v450, %v450
    %v461 = vlaneseq
    %v462 = vshrl.u32 %v461, 7
    %v463 = vsub.s32 0, %v462
    %v464 = vrot.slane %v459, %v463
    %v466 = vpack.i.b16 %v457, %v457
    %v468 = vlaneseq
    %v469 = vshrl.u32 %v468, 7
    %v470 = vsub.s32 0, %v469
    %v471 = vrot.slane %v466, %v470
    %v472 = vadd.bf16 %v432, %v464
    %v473 = vadd.bf16 %v433, %v471
    %v474 = vmax.bf16 %v472, 0
    %v475 = vmax.bf16 %v473, 0
    %v476 = vld [vmem:[#allocation5] sm:$0xf]
    %v477 = vld [vmem:[#allocation5 + $0x4] sm:$0xf]
    %v478 = vld [vmem:[#allocation5 + $0x8] sm:$0xf]
    %v479 = vld [vmem:[#allocation5 + $0xc] sm:$0xf]
    %v480 = vld [vmem:[#allocation5 + $0x10] sm:$0xf]
    %v481 = vld [vmem:[#allocation5 + $0x14] sm:$0xf]
    %v482 = vld [vmem:[#allocation5 + $0x18] sm:$0xf]
    %v483 = vld [vmem:[#allocation5 + $0x1c] sm:$0xf]
    %v484 = vld [vmem:[#allocation5 + $0x20] sm:$0xf]
    %v485 = vld [vmem:[#allocation5 + $0x24] sm:$0xf]
    %v486 = vld [vmem:[#allocation5 + $0x28] sm:$0xf]
    %v487 = vld [vmem:[#allocation5 + $0x2c] sm:$0xf]
    %v488 = vld [vmem:[#allocation5 + $0x30] sm:$0xf]
    %v489 = vld [vmem:[#allocation5 + $0x34] sm:$0xf]
    %v490 = vld [vmem:[#allocation5 + $0x38] sm:$0xf]
    %v491 = vld [vmem:[#allocation5 + $0x3c] sm:$0xf]
    %v492 = vld [vmem:[#allocation5 + $0x40] sm:$0xf]
    %v493 = vld [vmem:[#allocation5 + $0x44] sm:$0xf]
    %v494 = vld [vmem:[#allocation5 + $0x48] sm:$0xf]
    %v495 = vld [vmem:[#allocation5 + $0x4c] sm:$0xf]
    %v496 = vld [vmem:[#allocation5 + $0x50] sm:$0xf]
    %v497 = vld [vmem:[#allocation5 + $0x54] sm:$0xf]
    %v498 = vld [vmem:[#allocation5 + $0x58] sm:$0xf]
    %v499 = vld [vmem:[#allocation5 + $0x5c] sm:$0xf]
    %v500 = vld [vmem:[#allocation5 + $0x60] sm:$0xf]
    %v501 = vld [vmem:[#allocation5 + $0x64] sm:$0xf]
    %v502 = vld [vmem:[#allocation5 + $0x68] sm:$0xf]
    %v503 = vld [vmem:[#allocation5 + $0x6c] sm:$0xf]
    %v504 = vld [vmem:[#allocation5 + $0x70] sm:$0xf]
    %v505 = vld [vmem:[#allocation5 + $0x74] sm:$0xf]
    %v506 = vld [vmem:[#allocation5 + $0x78] sm:$0xf]
    %v507 = vld [vmem:[#allocation5 + $0x7c] sm:$0xf]
    %v540 = vunpack.c.l.b16 %v476
    %v541 = vunpack.c.l.b16 %v477
    %v542 = vunpack.c.l.b16 %v478
    %v543 = vunpack.c.l.b16 %v479
    %v544 = vunpack.c.l.b16 %v480
    %v545 = vunpack.c.l.b16 %v481
    %v546 = vunpack.c.l.b16 %v482
    %v547 = vunpack.c.l.b16 %v483
    %v548 = vunpack.c.l.b16 %v484
    %v549 = vunpack.c.l.b16 %v485
    %v550 = vunpack.c.l.b16 %v486
    %v551 = vunpack.c.l.b16 %v487
    %v552 = vunpack.c.l.b16 %v488
    %v553 = vunpack.c.l.b16 %v489
    %v554 = vunpack.c.l.b16 %v490
    %v555 = vunpack.c.l.b16 %v491
    %v556 = vunpack.c.l.b16 %v492
    %v557 = vunpack.c.l.b16 %v493
    %v558 = vunpack.c.l.b16 %v494
    %v559 = vunpack.c.l.b16 %v495
    %v560 = vunpack.c.l.b16 %v496
    %v561 = vunpack.c.l.b16 %v497
    %v562 = vunpack.c.l.b16 %v498
    %v563 = vunpack.c.l.b16 %v499
    %v564 = vunpack.c.l.b16 %v500
    %v565 = vunpack.c.l.b16 %v501
    %v566 = vunpack.c.l.b16 %v502
    %v567 = vunpack.c.l.b16 %v503
    %v568 = vunpack.c.l.b16 %v504
    %v569 = vunpack.c.l.b16 %v505
    %v570 = vunpack.c.l.b16 %v506
    %v571 = vunpack.c.l.b16 %v507
    %v572 = vpack.c.b16 %v541, %v540
    %v573 = vpack.c.b16 %v543, %v542
    %v574 = vpack.c.b16 %v545, %v544
    %v575 = vpack.c.b16 %v547, %v546
    %v576 = vpack.c.b16 %v549, %v548
    %v577 = vpack.c.b16 %v551, %v550
    %v578 = vpack.c.b16 %v553, %v552
    %v579 = vpack.c.b16 %v555, %v554
    %v580 = vpack.c.b16 %v557, %v556
    %v581 = vpack.c.b16 %v559, %v558
    %v582 = vpack.c.b16 %v561, %v560
    %v583 = vpack.c.b16 %v563, %v562
    %v584 = vpack.c.b16 %v565, %v564
    %v585 = vpack.c.b16 %v567, %v566
    %v586 = vpack.c.b16 %v569, %v568
    %v587 = vpack.c.b16 %v571, %v570
    %604 = vmatprep.subr.bf16.mxu0 0
    %605 = vmatpush1.bf16.msra.mxu0 %v572
    %606 = vmatprep.subr.bf16.mxu0 0
    %607 = vmatpush1.bf16.msra.mxu0 %v573
    %608 = vmatprep.subr.bf16.mxu0 0
    %609 = vmatpush1.bf16.msra.mxu0 %v574
    %610 = vmatprep.subr.bf16.mxu0 0
    %611 = vmatpush1.bf16.msra.mxu0 %v575
    %612 = vmatprep.subr.bf16.mxu0 0
    %613 = vmatpush1.bf16.msra.mxu0 %v576
    %614 = vmatprep.subr.bf16.mxu0 0
    %615 = vmatpush1.bf16.msra.mxu0 %v577
    %616 = vmatprep.subr.bf16.mxu0 0
    %617 = vmatpush1.bf16.msra.mxu0 %v578
    %618 = vmatprep.subr.bf16.mxu0 0
    %619 = vmatpush1.bf16.msra.mxu0 %v579
    %620 = vmatprep.subr.bf16.mxu0 0
    %621 = vmatpush1.bf16.msra.mxu0 %v580
    %622 = vmatprep.subr.bf16.mxu0 0
    %623 = vmatpush1.bf16.msra.mxu0 %v581
    %624 = vmatprep.subr.bf16.mxu0 0
    %625 = vmatpush1.bf16.msra.mxu0 %v582
    %626 = vmatprep.subr.bf16.mxu0 0
    %627 = vmatpush1.bf16.msra.mxu0 %v583
    %628 = vmatprep.subr.bf16.mxu0 0
    %629 = vmatpush1.bf16.msra.mxu0 %v584
    %630 = vmatprep.subr.bf16.mxu0 0
    %631 = vmatpush1.bf16.msra.mxu0 %v585
    %632 = vmatprep.subr.bf16.mxu0 0
    %633 = vmatpush1.bf16.msra.mxu0 %v586
    %634 = vmatprep.subr.bf16.mxu0 0
    %635 = vmatpush1.bf16.msra.mxu0 %v587
    %636 = vmatprep.mubr.bf16.mxu0 %v475
    %637 = vmatmul.mubr.bf16.gmra.mrb[0].mxu0 %v474
    %v638 = vpop.f32.mrb[0].mxu0
    %v639 = vadd.f32 0.0, %v638
    %v640 = vpop.f32.mrb[0].mxu0
    %v641 = vpop.f32.mrb[0].mxu0
    %v642 = vpop.f32.mrb[0].mxu0
    %643 = vdwg.mxu0
    %v644 = vpack.c.bf16 %v639, %v639
    %v645 = vld [vmem:[%s6] sm:$0x1]
    %v647 = vpack.i.b16 %v645, %v645
    %v649 = vlaneseq
    %v650 = vshrl.u32 %v649, 7
    %v651 = vsub.s32 0, %v650
    %v652 = vrot.slane %v647, %v651
    %v653 = vadd.bf16 %v644, %v652
    %v654 = vmax.bf16 %v653, 0
    %v655 = vld [vmem:[#allocation7] sm:$0xf]
    %v656 = vld [vmem:[#allocation7 + $0x4] sm:$0xf]
    %v657 = vld [vmem:[#allocation7 + $0x8] sm:$0xf]
    %v658 = vld [vmem:[#allocation7 + $0xc] sm:$0xf]
    %v659 = vld [vmem:[#allocation7 + $0x10] sm:$0xf]
    %v660 = vld [vmem:[#allocation7 + $0x14] sm:$0xf]
    %v661 = vld [vmem:[#allocation7 + $0x18] sm:$0xf]
    %v662 = vld [vmem:[#allocation7 + $0x1c] sm:$0xf]
    %v663 = vld [vmem:[#allocation7 + $0x20] sm:$0xf]
    %v664 = vld [vmem:[#allocation7 + $0x24] sm:$0xf]
    %v665 = vld [vmem:[#allocation7 + $0x28] sm:$0xf]
    %v666 = vld [vmem:[#allocation7 + $0x2c] sm:$0xf]
    %v667 = vld [vmem:[#allocation7 + $0x30] sm:$0xf]
    %v668 = vld [vmem:[#allocation7 + $0x34] sm:$0xf]
    %v669 = vld [vmem:[#allocation7 + $0x38] sm:$0xf]
    %v670 = vld [vmem:[#allocation7 + $0x3c] sm:$0xf]
    %v671 = vld [vmem:[%s8] sm:$0x1]
    %v673 = vlaneseq
    %v674 = vshrl.u32 %v673, 7
    %v675 = vsub.s32 0, %v674
    %v676 = vrot.slane %v671, %v675
    %v694 = vunpack.c.l.b16 %v655
    %v695 = vunpack.c.l.b16 %v656
    %v696 = vunpack.c.l.b16 %v657
    %v697 = vunpack.c.l.b16 %v658
    %v698 = vunpack.c.l.b16 %v659
    %v699 = vunpack.c.l.b16 %v660
    %v700 = vunpack.c.l.b16 %v661
    %v701 = vunpack.c.l.b16 %v662
    %v702 = vunpack.c.l.b16 %v663
    %v703 = vunpack.c.l.b16 %v664
    %v704 = vunpack.c.l.b16 %v665
    %v705 = vunpack.c.l.b16 %v666
    %v706 = vunpack.c.l.b16 %v667
    %v707 = vunpack.c.l.b16 %v668
    %v708 = vunpack.c.l.b16 %v669
    %v709 = vunpack.c.l.b16 %v670
    %v710 = vpack.c.b16 %v695, %v694
    %v711 = vpack.c.b16 %v697, %v696
    %v712 = vpack.c.b16 %v699, %v698
    %v713 = vpack.c.b16 %v701, %v700
    %v714 = vpack.c.b16 %v703, %v702
    %v715 = vpack.c.b16 %v705, %v704
    %v716 = vpack.c.b16 %v707, %v706
    %v717 = vpack.c.b16 %v709, %v708
    %726 = vmatprep.subr.bf16.mxu0 0
    %727 = vmatpush1.bf16.msra.mxu0 %v710
    %728 = vmatprep.subr.bf16.mxu0 0
    %729 = vmatpush1.bf16.msra.mxu0 %v711
    %730 = vmatprep.subr.bf16.mxu0 0
    %731 = vmatpush1.bf16.msra.mxu0 %v712
    %732 = vmatprep.subr.bf16.mxu0 0
    %733 = vmatpush1.bf16.msra.mxu0 %v713
    %734 = vmatprep.subr.bf16.mxu0 0
    %735 = vmatpush1.bf16.msra.mxu0 %v714
    %736 = vmatprep.subr.bf16.mxu0 0
    %737 = vmatpush1.bf16.msra.mxu0 %v715
    %738 = vmatprep.subr.bf16.mxu0 0
    %739 = vmatpush1.bf16.msra.mxu0 %v716
    %740 = vmatprep.subr.bf16.mxu0 0
    %741 = vmatpush1.bf16.msra.mxu0 %v717
    %742 = vmatprep.subr.bf16.mxu0 0
    %743 = vmatpush1.bf16.msra.mxu0 0
    %744 = vmatprep.subr.bf16.mxu0 0
    %745 = vmatpush1.bf16.msra.mxu0 0
    %746 = vmatprep.subr.bf16.mxu0 0
    %747 = vmatpush1.bf16.msra.mxu0 0
    %748 = vmatprep.subr.bf16.mxu0 0
    %749 = vmatpush1.bf16.msra.mxu0 0
    %750 = vmatprep.subr.bf16.mxu0 0
    %751 = vmatpush1.bf16.msra.mxu0 0
    %752 = vmatprep.subr.bf16.mxu0 0
    %753 = vmatpush1.bf16.msra.mxu0 0
    %754 = vmatprep.subr.bf16.mxu0 0
    %755 = vmatpush1.bf16.msra.mxu0 0
    %756 = vmatprep.subr.bf16.mxu0 0
    %757 = vmatpush1.bf16.msra.mxu0 0
    %758 = vmatprep.mubr.bf16.mxu0 0
    %759 = vmatmul.mubr.bf16.gmra.mrb[0].mxu0 %v654
    %v760 = vpop.f32.mrb[0].mxu0
    %v761 = vadd.f32 %v676, %v760
    %v762 = vpop.f32.mrb[0].mxu0
    %v763 = vpop.f32.mrb[0].mxu0
    %v764 = vpop.f32.mrb[0].mxu0
    %765 = vdwg.mxu0
    %766 = vst [vmem:[#allocation8] sm:$0xff] %v761
    // Predicated region
    $region50: #{tpu_custom_call.1} parent=1 // pred_check
      _
    $region51: #{tpu_custom_call.1} parent=1 // pred_check_branch
      %768 = sbr.rel (0) target = $region53
    $region52: #{tpu_custom_call.1} parent=1 // pred_region
      %s770 = ssub.s32 128, 128
      %771 = vsyncadd [#allocation4], %s770
      %s773 = sshll.u32 [#allocation8], 4
      %s774 = int_to_ptr.vmem [resolvable:$true] %s773
      %776 = dma.vmem_to_hbm [thread:$0]  %s774, 128, %s9, [#allocation4]
    $region53: #{tpu_custom_call.1} parent=1 // pred_fallthru
      _
    // Predicated region
    $region54: #{tpu_custom_call.1} parent=1 // pred_check
      _
    $region55: #{tpu_custom_call.1} parent=1 // pred_check_branch
      %778 = sbr.rel (0) target = $region57
    $region56: #{tpu_custom_call.1} parent=1 // pred_region
      %779 = dma.done [#allocation4], 128
    $region57: #{tpu_custom_call.1} parent=1 // pred_fallthru
      _
    %780 = vsyncpa [#allocation3], 1
    %781 = vsyncpa [#allocation6], 1
    %782 = vsyncpa [#allocation4], 1

// kernel: tpu_custom_call.1
$region0: #{tpu_custom_call.1}
  #allocation0 [shape = 'u32[]', space=smem, size = 0x4, offset = 0x4, fixed_abs, tag = 'smem constant byte address 0x4 - core index']
  #allocation1 [shape = 'u32[144,128]{1,0:T(1,128)}', space=vmem, size = 0x12000, scoped, tag = 'internal scratch']
  %s0 = inlined_call_operand.vmem [shape: f32[8,4], index: 0, kind: input, shape index: {}]
  %s1 = inlined_call_operand.vmem [shape: f32[4,256], index: 1, kind: input, shape index: {}]
  %s2 = inlined_call_operand.vmem [shape: f32[1,256], index: 2, kind: input, shape index: {}]
  %s3 = inlined_call_operand.hbm [shape: bf16[256,256], index: 3, kind: input, shape index: {}]
  %s4 = inlined_call_operand.vmem [shape: bf16[1,256], index: 4, kind: input, shape index: {}]
  %s5 = inlined_call_operand.hbm [shape: bf16[256,128], index: 5, kind: input, shape index: {}]
  %s6 = inlined_call_operand.vmem [shape: bf16[1,128], index: 6, kind: input, shape index: {}]
  %s7 = inlined_call_operand.hbm [shape: bf16[128,128], index: 7, kind: input, shape index: {}]
  %s8 = inlined_call_operand.vmem [shape: f32[1,128], index: 8, kind: input, shape index: {}]
  %s9 = inlined_call_operand.hbm [shape: f32[8,128], index: 9, kind: output, shape index: {}]
  %s10 = sld [smem:[#allocation0]]
  $region58: #{tpu_custom_call.1} parent=0
    _
  %s12 = ssub.s32 1, %s10
  %s13 = scalar_select 0, %s12, %s10
  $region1: #{tpu_custom_call.1} parent=0
    #allocation2 [shape = 'u8[131072]{0}', space=vmem, size = 0x20000, scoped, tag = 'input window, operand 3, single buffered']
    #allocation3 [shape = 's32[1]{0}', space=sflag, size = 0x4, scoped, tag = 'scoped memory for tpu_custom_call.1']
    #allocation4 [shape = 's32[1]{0}', space=sflag, size = 0x4, scoped, tag = 'scoped memory for tpu_custom_call.1']
    #allocation5 [shape = 'u8[65536]{0}', space=vmem, size = 0x10000, scoped, tag = 'input window, operand 5, single buffered']
    #allocation6 [shape = 's32[1]{0}', space=sflag, size = 0x4, scoped, tag = 'scoped memory for tpu_custom_call.1']
    #allocation7 [shape = 'u8[32768]{0}', space=vmem, size = 0x8000, scoped, tag = 'input window, operand 7, single buffered']
    #allocation8 [shape = 'u8[4096]{0}', space=vmem, size = 0x1000, scoped, tag = 'output window, operand 0, single buffered']
    %14 = vsyncpa [#allocation3], 0
    %15 = vsyncpa [#allocation6], 0
    %16 = vsyncpa [#allocation4], 0
    // Predicated region
    $region2: #{tpu_custom_call.1} parent=1 // pred_check
      _
    $region3: #{tpu_custom_call.1} parent=1 // pred_check_branch
      %18 = sbr.rel (0) target = $region5
    $region4: #{tpu_custom_call.1} parent=1 // pred_region
      _
    $region5: #{tpu_custom_call.1} parent=1 // pred_fallthru
      _
    // Predicated region
    $region6: #{tpu_custom_call.1} parent=1 // pred_check
      _
    $region7: #{tpu_custom_call.1} parent=1 // pred_check_branch
      %20 = sbr.rel (0) target = $region9
    $region8: #{tpu_custom_call.1} parent=1 // pred_region
      _
    $region9: #{tpu_custom_call.1} parent=1 // pred_fallthru
      _
    // Predicated region
    $region10: #{tpu_custom_call.1} parent=1 // pred_check
      _
    $region11: #{tpu_custom_call.1} parent=1 // pred_check_branch
      %22 = sbr.rel (0) target = $region13
    $region12: #{tpu_custom_call.1} parent=1 // pred_region
      _
    $region13: #{tpu_custom_call.1} parent=1 // pred_fallthru
      _
    // Predicated region
    $region14: #{tpu_custom_call.1} parent=1 // pred_check
      _
    $region15: #{tpu_custom_call.1} parent=1 // pred_check_branch
      %24 = sbr.rel (0) target = $region17
    $region16: #{tpu_custom_call.1} parent=1 // pred_region
      %s26 = ssub.s32 4096, 4096
      %27 = vsyncadd [#allocation3], %s26
      %s28 = sshll.u32 [#allocation2], 4
      %s29 = int_to_ptr.vmem [resolvable:$true] %s28
      %34 = dma.hbm_to_vmem [thread:$0]  %s3, 4096, %s29, [#allocation3], 128, 128, 8
    $region17: #{tpu_custom_call.1} parent=1 // pred_fallthru
      _
    // Predicated region
    $region18: #{tpu_custom_call.1} parent=1 // pred_check
      _
    $region19: #{tpu_custom_call.1} parent=1 // pred_check_branch
      %36 = sbr.rel (0) target = $region21
    $region20: #{tpu_custom_call.1} parent=1 // pred_region
      _
    $region21: #{tpu_custom_call.1} parent=1 // pred_fallthru
      _
    // Predicated region
    $region22: #{tpu_custom_call.1} parent=1 // pred_check
      _
    $region23: #{tpu_custom_call.1} parent=1 // pred_check_branch
      %38 = sbr.rel (0) target = $region25
    $region24: #{tpu_custom_call.1} parent=1 // pred_region
      %s40 = ssub.s32 2048, 2048
      %41 = vsyncadd [#allocation6], %s40
      %s42 = sshll.u32 [#allocation5], 4
      %s43 = int_to_ptr.vmem [resolvable:$true] %s42
      %48 = dma.hbm_to_vmem [thread:$0]  %s5, 2048, %s43, [#allocation6], 64, 64, 4
    $region25: #{tpu_custom_call.1} parent=1 // pred_fallthru
      _
    // Predicated region
    $region26: #{tpu_custom_call.1} parent=1 // pred_check
      _
    $region27: #{tpu_custom_call.1} parent=1 // pred_check_branch
      %50 = sbr.rel (0) target = $region29
    $region28: #{tpu_custom_call.1} parent=1 // pred_region
      _
    $region29: #{tpu_custom_call.1} parent=1 // pred_fallthru
      _
    // Predicated region
    $region30: #{tpu_custom_call.1} parent=1 // pred_check
      _
    $region31: #{tpu_custom_call.1} parent=1 // pred_check_branch
      %52 = sbr.rel (0) target = $region33
    $region32: #{tpu_custom_call.1} parent=1 // pred_region
      %s54 = ssub.s32 1024, 1024
      %55 = vsyncadd [#allocation6], %s54
      %s56 = sshll.u32 [#allocation7], 4
      %s57 = int_to_ptr.vmem [resolvable:$true] %s56
      %62 = dma.hbm_to_vmem [thread:$0]  %s7, 1024, %s57, [#allocation6], 64, 64, 4
    $region33: #{tpu_custom_call.1} parent=1 // pred_fallthru
      _
    // Predicated region
    $region34: #{tpu_custom_call.1} parent=1 // pred_check
      _
    $region35: #{tpu_custom_call.1} parent=1 // pred_check_branch
      %64 = sbr.rel (0) target = $region37
    $region36: #{tpu_custom_call.1} parent=1 // pred_region
      _
    $region37: #{tpu_custom_call.1} parent=1 // pred_fallthru
      _
    // Predicated region
    $region38: #{tpu_custom_call.1} parent=1 // pred_check
      _
    $region39: #{tpu_custom_call.1} parent=1 // pred_check_branch
      %66 = sbr.rel (0) target = $region41
    $region40: #{tpu_custom_call.1} parent=1 // pred_region
      %67 = dma.done [#allocation3], 4096
    $region41: #{tpu_custom_call.1} parent=1 // pred_fallthru
      _
    // Predicated region
    $region42: #{tpu_custom_call.1} parent=1 // pred_check
      _
    $region43: #{tpu_custom_call.1} parent=1 // pred_check_branch
      %69 = sbr.rel (0) target = $region45
    $region44: #{tpu_custom_call.1} parent=1 // pred_region
      %70 = dma.done [#allocation6], 2048
    $region45: #{tpu_custom_call.1} parent=1 // pred_fallthru
      _
    // Predicated region
    $region46: #{tpu_custom_call.1} parent=1 // pred_check
      _
    $region47: #{tpu_custom_call.1} parent=1 // pred_check_branch
      %72 = sbr.rel (0) target = $region49
    $region48: #{tpu_custom_call.1} parent=1 // pred_region
      %73 = dma.done [#allocation6], 1024
    $region49: #{tpu_custom_call.1} parent=1 // pred_fallthru
      _
    %v75 = vld [vmem:[%s0] sm:$0xff]
    %v76 = vld [vmem:[%s1] sm:$0xff]
    %78 = vset.pattern.permute.xlu0 0
    %79 = vperm.xlu0 %78, %v75
    %v80 = vpop.permute.xlu0 %79
    %v83 = vlaneseq
    %v84 = vshrl.u32 %v83, 7
    %v85 = vsub.s32 0, %v84
    %v86 = vrot.slane %v76, %v85
    %v87 = vlaneseq
    %v88 = vshrl.u32 %v87, 7
    %v89 = vsub.s32 4, %v88
    %v90 = vrot.slane %v76, %v89
    %v93 = vlaneseq
    %v94 = vshrl.u32 %v93, 7
    %v95 = vsub.s32 0, %v94
    %v96 = vrot.slane %v86, %v95
    %v97 = vlaneseq
    %v98 = vshrl.u32 %v97, 7
    %v99 = vsub.s32 0, %v98
    %v100 = vrot.slane %v90, %v99
    %v101 = vmul.f32 %v80, %v96
    %v102 = vmul.f32 %v80, %v100
    %103 = vset.pattern.permute.xlu0 1
    %104 = vperm.xlu0 %103, %v75
    %v105 = vpop.permute.xlu0 %104
    %v107 = vlaneseq
    %v108 = vshrl.u32 %v107, 7
    %v109 = vsub.s32 1, %v108
    %v110 = vrot.slane %v76, %v109
    %v111 = vlaneseq
    %v112 = vshrl.u32 %v111, 7
    %v113 = vsub.s32 5, %v112
    %v114 = vrot.slane %v76, %v113
    %v117 = vlaneseq
    %v118 = vshrl.u32 %v117, 7
    %v119 = vsub.s32 1, %v118
    %v120 = vrot.slane %v110, %v119
    %v121 = vlaneseq
    %v122 = vshrl.u32 %v121, 7
    %v123 = vsub.s32 1, %v122
    %v124 = vrot.slane %v114, %v123
    %v125 = vmul.f32 %v105, %v120
    %v126 = vmul.f32 %v105, %v124
    %v127 = vadd.f32 %v101, %v125
    %v128 = vadd.f32 %v102, %v126
    %129 = vset.pattern.permute.xlu0 2
    %130 = vperm.xlu0 %129, %v75
    %v131 = vpop.permute.xlu0 %130
    %v133 = vlaneseq
    %v134 = vshrl.u32 %v133, 7
    %v135 = vsub.s32 2, %v134
    %v136 = vrot.slane %v76, %v135
    %v137 = vlaneseq
    %v138 = vshrl.u32 %v137, 7
    %v139 = vsub.s32 6, %v138
    %v140 = vrot.slane %v76, %v139
    %v143 = vlaneseq
    %v144 = vshrl.u32 %v143, 7
    %v145 = vsub.s32 2, %v144
    %v146 = vrot.slane %v136, %v145
    %v147 = vlaneseq
    %v148 = vshrl.u32 %v147, 7
    %v149 = vsub.s32 2, %v148
    %v150 = vrot.slane %v140, %v149
    %v151 = vmul.f32 %v131, %v146
    %v152 = vmul.f32 %v131, %v150
    %v153 = vadd.f32 %v127, %v151
    %v154 = vadd.f32 %v128, %v152
    %155 = vset.pattern.permute.xlu0 3
    %156 = vperm.xlu0 %155, %v75
    %v157 = vpop.permute.xlu0 %156
    %v159 = vlaneseq
    %v160 = vshrl.u32 %v159, 7
    %v161 = vsub.s32 3, %v160
    %v162 = vrot.slane %v76, %v161
    %v163 = vlaneseq
    %v164 = vshrl.u32 %v163, 7
    %v165 = vsub.s32 7, %v164
    %v166 = vrot.slane %v76, %v165
    %v169 = vlaneseq
    %v170 = vshrl.u32 %v169, 7
    %v171 = vsub.s32 3, %v170
    %v172 = vrot.slane %v162, %v171
    %v173 = vlaneseq
    %v174 = vshrl.u32 %v173, 7
    %v175 = vsub.s32 3, %v174
    %v176 = vrot.slane %v166, %v175
    %v177 = vmul.f32 %v157, %v172
    %v178 = vmul.f32 %v157, %v176
    %v179 = vadd.f32 %v153, %v177
    %v180 = vadd.f32 %v154, %v178
    %v181 = vld [vmem:[%s2] sm:$0x3]
    %v183 = vlaneseq
    %v184 = vshrl.u32 %v183, 7
    %v185 = vsub.s32 0, %v184
    %v186 = vrot.slane %v181, %v185
    %v187 = vlaneseq
    %v188 = vshrl.u32 %v187, 7
    %v189 = vsub.s32 1, %v188
    %v190 = vrot.slane %v181, %v189
    %v193 = vadd.f32 %v179, %v186
    %v194 = vadd.f32 %v180, %v190
    %v195 = vmax.f32 %v193, 0.0
    %v196 = vmax.f32 %v194, 0.0
    %v197 = vpack.c.bf16 %v195, %v195
    %v198 = vpack.c.bf16 %v196, %v196
    %v199 = vld [vmem:[#allocation2] sm:$0xff]
    %v200 = vld [vmem:[#allocation2 + $0x8] sm:$0xff]
    %v201 = vld [vmem:[#allocation2 + $0x10] sm:$0xff]
    %v202 = vld [vmem:[#allocation2 + $0x18] sm:$0xff]
    %v203 = vld [vmem:[#allocation2 + $0x20] sm:$0xff]
    %v204 = vld [vmem:[#allocation2 + $0x28] sm:$0xff]
    %v205 = vld [vmem:[#allocation2 + $0x30] sm:$0xff]
    %v206 = vld [vmem:[#allocation2 + $0x38] sm:$0xff]
    %v207 = vld [vmem:[#allocation2 + $0x40] sm:$0xff]
    %v208 = vld [vmem:[#allocation2 + $0x48] sm:$0xff]
    %v209 = vld [vmem:[#allocation2 + $0x50] sm:$0xff]
    %v210 = vld [vmem:[#allocation2 + $0x58] sm:$0xff]
    %v211 = vld [vmem:[#allocation2 + $0x60] sm:$0xff]
    %v212 = vld [vmem:[#allocation2 + $0x68] sm:$0xff]
    %v213 = vld [vmem:[#allocation2 + $0x70] sm:$0xff]
    %v214 = vld [vmem:[#allocation2 + $0x78] sm:$0xff]
    %v215 = vld [vmem:[#allocation2 + $0x80] sm:$0xff]
    %v216 = vld [vmem:[#allocation2 + $0x88] sm:$0xff]
    %v217 = vld [vmem:[#allocation2 + $0x90] sm:$0xff]
    %v218 = vld [vmem:[#allocation2 + $0x98] sm:$0xff]
    %v219 = vld [vmem:[#allocation2 + $0xa0] sm:$0xff]
    %v220 = vld [vmem:[#allocation2 + $0xa8] sm:$0xff]
    %v221 = vld [vmem:[#allocation2 + $0xb0] sm:$0xff]
    %v222 = vld [vmem:[#allocation2 + $0xb8] sm:$0xff]
    %v223 = vld [vmem:[#allocation2 + $0xc0] sm:$0xff]
    %v224 = vld [vmem:[#allocation2 + $0xc8] sm:$0xff]
    %v225 = vld [vmem:[#allocation2 + $0xd0] sm:$0xff]
    %v226 = vld [vmem:[#allocation2 + $0xd8] sm:$0xff]
    %v227 = vld [vmem:[#allocation2 + $0xe0] sm:$0xff]
    %v228 = vld [vmem:[#allocation2 + $0xe8] sm:$0xff]
    %v229 = vld [vmem:[#allocation2 + $0xf0] sm:$0xff]
    %v230 = vld [vmem:[#allocation2 + $0xf8] sm:$0xff]
    %v263 = vunpack.c.l.b16 %v199
    %v264 = vunpack.c.h.b16 %v199
    %v265 = vunpack.c.l.b16 %v200
    %v266 = vunpack.c.h.b16 %v200
    %v267 = vunpack.c.l.b16 %v201
    %v268 = vunpack.c.h.b16 %v201
    %v269 = vunpack.c.l.b16 %v202
    %v270 = vunpack.c.h.b16 %v202
    %v271 = vunpack.c.l.b16 %v203
    %v272 = vunpack.c.h.b16 %v203
    %v273 = vunpack.c.l.b16 %v204
    %v274 = vunpack.c.h.b16 %v204
    %v275 = vunpack.c.l.b16 %v205
    %v276 = vunpack.c.h.b16 %v205
    %v277 = vunpack.c.l.b16 %v206
    %v278 = vunpack.c.h.b16 %v206
    %v279 = vunpack.c.l.b16 %v207
    %v280 = vunpack.c.h.b16 %v207
    %v281 = vunpack.c.l.b16 %v208
    %v282 = vunpack.c.h.b16 %v208
    %v283 = vunpack.c.l.b16 %v209
    %v284 = vunpack.c.h.b16 %v209
    %v285 = vunpack.c.l.b16 %v210
    %v286 = vunpack.c.h.b16 %v210
    %v287 = vunpack.c.l.b16 %v211
    %v288 = vunpack.c.h.b16 %v211
    %v289 = vunpack.c.l.b16 %v212
    %v290 = vunpack.c.h.b16 %v212
    %v291 = vunpack.c.l.b16 %v213
    %v292 = vunpack.c.h.b16 %v213
    %v293 = vunpack.c.l.b16 %v214
    %v294 = vunpack.c.h.b16 %v214
    %v295 = vunpack.c.l.b16 %v215
    %v296 = vunpack.c.h.b16 %v215
    %v297 = vunpack.c.l.b16 %v216
    %v298 = vunpack.c.h.b16 %v216
    %v299 = vunpack.c.l.b16 %v217
    %v300 = vunpack.c.h.b16 %v217
    %v301 = vunpack.c.l.b16 %v218
    %v302 = vunpack.c.h.b16 %v218
    %v303 = vunpack.c.l.b16 %v219
    %v304 = vunpack.c.h.b16 %v219
    %v305 = vunpack.c.l.b16 %v220
    %v306 = vunpack.c.h.b16 %v220
    %v307 = vunpack.c.l.b16 %v221
    %v308 = vunpack.c.h.b16 %v221
    %v309 = vunpack.c.l.b16 %v222
    %v310 = vunpack.c.h.b16 %v222
    %v311 = vunpack.c.l.b16 %v223
    %v312 = vunpack.c.h.b16 %v223
    %v313 = vunpack.c.l.b16 %v224
    %v314 = vunpack.c.h.b16 %v224
    %v315 = vunpack.c.l.b16 %v225
    %v316 = vunpack.c.h.b16 %v225
    %v317 = vunpack.c.l.b16 %v226
    %v318 = vunpack.c.h.b16 %v226
    %v319 = vunpack.c.l.b16 %v227
    %v320 = vunpack.c.h.b16 %v227
    %v321 = vunpack.c.l.b16 %v228
    %v322 = vunpack.c.h.b16 %v228
    %v323 = vunpack.c.l.b16 %v229
    %v324 = vunpack.c.h.b16 %v229
    %v325 = vunpack.c.l.b16 %v230
    %v326 = vunpack.c.h.b16 %v230
    %v327 = vpack.c.b16 %v265, %v263
    %v328 = vpack.c.b16 %v266, %v264
    %v329 = vpack.c.b16 %v269, %v267
    %v330 = vpack.c.b16 %v270, %v268
    %v331 = vpack.c.b16 %v273, %v271
    %v332 = vpack.c.b16 %v274, %v272
    %v333 = vpack.c.b16 %v277, %v275
    %v334 = vpack.c.b16 %v278, %v276
    %v335 = vpack.c.b16 %v281, %v279
    %v336 = vpack.c.b16 %v282, %v280
    %v337 = vpack.c.b16 %v285, %v283
    %v338 = vpack.c.b16 %v286, %v284
    %v339 = vpack.c.b16 %v289, %v287
    %v340 = vpack.c.b16 %v290, %v288
    %v341 = vpack.c.b16 %v293, %v291
    %v342 = vpack.c.b16 %v294, %v292
    %v343 = vpack.c.b16 %v297, %v295
    %v344 = vpack.c.b16 %v298, %v296
    %v345 = vpack.c.b16 %v301, %v299
    %v346 = vpack.c.b16 %v302, %v300
    %v347 = vpack.c.b16 %v305, %v303
    %v348 = vpack.c.b16 %v306, %v304
    %v349 = vpack.c.b16 %v309, %v307
    %v350 = vpack.c.b16 %v310, %v308
    %v351 = vpack.c.b16 %v313, %v311
    %v352 = vpack.c.b16 %v314, %v312
    %v353 = vpack.c.b16 %v317, %v315
    %v354 = vpack.c.b16 %v318, %v316
    %v355 = vpack.c.b16 %v321, %v319
    %v356 = vpack.c.b16 %v322, %v320
    %v357 = vpack.c.b16 %v325, %v323
    %v358 = vpack.c.b16 %v326, %v324
    %391 = vmatprep.subr.bf16.mxu0 %v328
    %392 = vmatpush1.bf16.msra.mxu0 %v327
    %393 = vmatprep.subr.bf16.mxu0 %v330
    %394 = vmatpush1.bf16.msra.mxu0 %v329
    %395 = vmatprep.subr.bf16.mxu0 %v332
    %396 = vmatpush1.bf16.msra.mxu0 %v331
    %397 = vmatprep.subr.bf16.mxu0 %v334
    %398 = vmatpush1.bf16.msra.mxu0 %v333
    %399 = vmatprep.subr.bf16.mxu0 %v336
    %400 = vmatpush1.bf16.msra.mxu0 %v335
    %401 = vmatprep.subr.bf16.mxu0 %v338
    %402 = vmatpush1.bf16.msra.mxu0 %v337
    %403 = vmatprep.subr.bf16.mxu0 %v340
    %404 = vmatpush1.bf16.msra.mxu0 %v339
    %405 = vmatprep.subr.bf16.mxu0 %v342
    %406 = vmatpush1.bf16.msra.mxu0 %v341
    %407 = vmatprep.subr.bf16.mxu0 %v344
    %408 = vmatpush1.bf16.msra.mxu0 %v343
    %409 = vmatprep.subr.bf16.mxu0 %v346
    %410 = vmatpush1.bf16.msra.mxu0 %v345
    %411 = vmatprep.subr.bf16.mxu0 %v348
    %412 = vmatpush1.bf16.msra.mxu0 %v347
    %413 = vmatprep.subr.bf16.mxu0 %v350
    %414 = vmatpush1.bf16.msra.mxu0 %v349
    %415 = vmatprep.subr.bf16.mxu0 %v352
    %416 = vmatpush1.bf16.msra.mxu0 %v351
    %417 = vmatprep.subr.bf16.mxu0 %v354
    %418 = vmatpush1.bf16.msra.mxu0 %v353
    %419 = vmatprep.subr.bf16.mxu0 %v356
    %420 = vmatpush1.bf16.msra.mxu0 %v355
    %421 = vmatprep.subr.bf16.mxu0 %v358
    %422 = vmatpush1.bf16.msra.mxu0 %v357
    %423 = vmatprep.mubr.bf16.mxu0 %v198
    %424 = vmatmul.mubr.bf16.gmra.mrb[0].mxu0 %v197
    %v425 = vpop.f32.mrb[0].mxu0
    %v426 = vadd.f32 0.0, %v425
    %v427 = vpop.f32.mrb[0].mxu0
    %v428 = vadd.f32 0.0, %v427
    %v429 = vpop.f32.mrb[0].mxu0
    %v430 = vpop.f32.mrb[0].mxu0
    %431 = vdwg.mxu0
    %v432 = vpack.c.bf16 %v426, %v426
    %v433 = vpack.c.bf16 %v428, %v428
    %v434 = vld [vmem:[%s4] sm:$0x3]
    %v437 = vunpack.c.l.s4 1966171168
    %v438 = vunpack.c.0.s8 %v437
    %v439 = vlaneseq
    %v440 = vshrl.u32 %v439, 7
    %v441 = vsub.s32 %v438, %v440
    %v442 = vrot.slane %v434, %v441
    %v443 = vcombine.high %v442, %v442
    %v445 = vunpack.c.l.s4 1966171168
    %v446 = vunpack.c.0.s8 %v445
    %v447 = vlaneseq
    %v448 = vshrl.u32 %v447, 7
    %v449 = vsub.s32 %v446, %v448
    %v450 = vrot.slane %v442, %v449
    %v452 = vunpack.c.l.s4 1966171168
    %v453 = vunpack.c.0.s8 %v452
    %v454 = vlaneseq
    %v455 = vshrl.u32 %v454, 7
    %v456 = vsub.s32 %v453, %v455
    %v457 = vrot.slane %v443, %v456
    %v459 = vpack.i.b16 %v450, %v450
    %v461 = vlaneseq
    %v462 = vshrl.u32 %v461, 7
    %v463 = vsub.s32 0, %v462
    %v464 = vrot.slane %v459, %v463
    %v466 = vpack.i.b16 %v457, %v457
    %v468 = vlaneseq
    %v469 = vshrl.u32 %v468, 7
    %v470 = vsub.s32 0, %v469
    %v471 = vrot.slane %v466, %v470
    %v472 = vadd.bf16 %v432, %v464
    %v473 = vadd.bf16 %v433, %v471
    %v474 = vmax.bf16 %v472, 0
    %v475 = vmax.bf16 %v473, 0
    %v476 = vld [vmem:[#allocation5] sm:$0xf]
    %v477 = vld [vmem:[#allocation5 + $0x4] sm:$0xf]
    %v478 = vld [vmem:[#allocation5 + $0x8] sm:$0xf]
    %v479 = vld [vmem:[#allocation5 + $0xc] sm:$0xf]
    %v480 = vld [vmem:[#allocation5 + $0x10] sm:$0xf]
    %v481 = vld [vmem:[#allocation5 + $0x14] sm:$0xf]
    %v482 = vld [vmem:[#allocation5 + $0x18] sm:$0xf]
    %v483 = vld [vmem:[#allocation5 + $0x1c] sm:$0xf]
    %v484 = vld [vmem:[#allocation5 + $0x20] sm:$0xf]
    %v485 = vld [vmem:[#allocation5 + $0x24] sm:$0xf]
    %v486 = vld [vmem:[#allocation5 + $0x28] sm:$0xf]
    %v487 = vld [vmem:[#allocation5 + $0x2c] sm:$0xf]
    %v488 = vld [vmem:[#allocation5 + $0x30] sm:$0xf]
    %v489 = vld [vmem:[#allocation5 + $0x34] sm:$0xf]
    %v490 = vld [vmem:[#allocation5 + $0x38] sm:$0xf]
    %v491 = vld [vmem:[#allocation5 + $0x3c] sm:$0xf]
    %v492 = vld [vmem:[#allocation5 + $0x40] sm:$0xf]
    %v493 = vld [vmem:[#allocation5 + $0x44] sm:$0xf]
    %v494 = vld [vmem:[#allocation5 + $0x48] sm:$0xf]
    %v495 = vld [vmem:[#allocation5 + $0x4c] sm:$0xf]
    %v496 = vld [vmem:[#allocation5 + $0x50] sm:$0xf]
    %v497 = vld [vmem:[#allocation5 + $0x54] sm:$0xf]
    %v498 = vld [vmem:[#allocation5 + $0x58] sm:$0xf]
    %v499 = vld [vmem:[#allocation5 + $0x5c] sm:$0xf]
    %v500 = vld [vmem:[#allocation5 + $0x60] sm:$0xf]
    %v501 = vld [vmem:[#allocation5 + $0x64] sm:$0xf]
    %v502 = vld [vmem:[#allocation5 + $0x68] sm:$0xf]
    %v503 = vld [vmem:[#allocation5 + $0x6c] sm:$0xf]
    %v504 = vld [vmem:[#allocation5 + $0x70] sm:$0xf]
    %v505 = vld [vmem:[#allocation5 + $0x74] sm:$0xf]
    %v506 = vld [vmem:[#allocation5 + $0x78] sm:$0xf]
    %v507 = vld [vmem:[#allocation5 + $0x7c] sm:$0xf]
    %v540 = vunpack.c.l.b16 %v476
    %v541 = vunpack.c.l.b16 %v477
    %v542 = vunpack.c.l.b16 %v478
    %v543 = vunpack.c.l.b16 %v479
    %v544 = vunpack.c.l.b16 %v480
    %v545 = vunpack.c.l.b16 %v481
    %v546 = vunpack.c.l.b16 %v482
    %v547 = vunpack.c.l.b16 %v483
    %v548 = vunpack.c.l.b16 %v484
    %v549 = vunpack.c.l.b16 %v485
    %v550 = vunpack.c.l.b16 %v486
    %v551 = vunpack.c.l.b16 %v487
    %v552 = vunpack.c.l.b16 %v488
    %v553 = vunpack.c.l.b16 %v489
    %v554 = vunpack.c.l.b16 %v490
    %v555 = vunpack.c.l.b16 %v491
    %v556 = vunpack.c.l.b16 %v492
    %v557 = vunpack.c.l.b16 %v493
    %v558 = vunpack.c.l.b16 %v494
    %v559 = vunpack.c.l.b16 %v495
    %v560 = vunpack.c.l.b16 %v496
    %v561 = vunpack.c.l.b16 %v497
    %v562 = vunpack.c.l.b16 %v498
    %v563 = vunpack.c.l.b16 %v499
    %v564 = vunpack.c.l.b16 %v500
    %v565 = vunpack.c.l.b16 %v501
    %v566 = vunpack.c.l.b16 %v502
    %v567 = vunpack.c.l.b16 %v503
    %v568 = vunpack.c.l.b16 %v504
    %v569 = vunpack.c.l.b16 %v505
    %v570 = vunpack.c.l.b16 %v506
    %v571 = vunpack.c.l.b16 %v507
    %v572 = vpack.c.b16 %v541, %v540
    %v573 = vpack.c.b16 %v543, %v542
    %v574 = vpack.c.b16 %v545, %v544
    %v575 = vpack.c.b16 %v547, %v546
    %v576 = vpack.c.b16 %v549, %v548
    %v577 = vpack.c.b16 %v551, %v550
    %v578 = vpack.c.b16 %v553, %v552
    %v579 = vpack.c.b16 %v555, %v554
    %v580 = vpack.c.b16 %v557, %v556
    %v581 = vpack.c.b16 %v559, %v558
    %v582 = vpack.c.b16 %v561, %v560
    %v583 = vpack.c.b16 %v563, %v562
    %v584 = vpack.c.b16 %v565, %v564
    %v585 = vpack.c.b16 %v567, %v566
    %v586 = vpack.c.b16 %v569, %v568
    %v587 = vpack.c.b16 %v571, %v570
    %604 = vmatprep.subr.bf16.mxu0 0
    %605 = vmatpush1.bf16.msra.mxu0 %v572
    %606 = vmatprep.subr.bf16.mxu0 0
    %607 = vmatpush1.bf16.msra.mxu0 %v573
    %608 = vmatprep.subr.bf16.mxu0 0
    %609 = vmatpush1.bf16.msra.mxu0 %v574
    %610 = vmatprep.subr.bf16.mxu0 0
    %611 = vmatpush1.bf16.msra.mxu0 %v575
    %612 = vmatprep.subr.bf16.mxu0 0
    %613 = vmatpush1.bf16.msra.mxu0 %v576
    %614 = vmatprep.subr.bf16.mxu0 0
    %615 = vmatpush1.bf16.msra.mxu0 %v577
    %616 = vmatprep.subr.bf16.mxu0 0
    %617 = vmatpush1.bf16.msra.mxu0 %v578
    %618 = vmatprep.subr.bf16.mxu0 0
    %619 = vmatpush1.bf16.msra.mxu0 %v579
    %620 = vmatprep.subr.bf16.mxu0 0
    %621 = vmatpush1.bf16.msra.mxu0 %v580
    %622 = vmatprep.subr.bf16.mxu0 0
    %623 = vmatpush1.bf16.msra.mxu0 %v581
    %624 = vmatprep.subr.bf16.mxu0 0
    %625 = vmatpush1.bf16.msra.mxu0 %v582
    %626 = vmatprep.subr.bf16.mxu0 0
    %627 = vmatpush1.bf16.msra.mxu0 %v583
    %628 = vmatprep.subr.bf16.mxu0 0
    %629 = vmatpush1.bf16.msra.mxu0 %v584
    %630 = vmatprep.subr.bf16.mxu0 0
    %631 = vmatpush1.bf16.msra.mxu0 %v585
    %632 = vmatprep.subr.bf16.mxu0 0
    %633 = vmatpush1.bf16.msra.mxu0 %v586
    %634 = vmatprep.subr.bf16.mxu0 0
    %635 = vmatpush1.bf16.msra.mxu0 %v587
    %636 = vmatprep.mubr.bf16.mxu0 %v475
    %637 = vmatmul.mubr.bf16.gmra.mrb[0].mxu0 %v474
    %v638 = vpop.f32.mrb[0].mxu0
    %v639 = vadd.f32 0.0, %v638
    %v640 = vpop.f32.mrb[0].mxu0
    %v641 = vpop.f32.mrb[0].mxu0
    %v642 = vpop.f32.mrb[0].mxu0
    %643 = vdwg.mxu0
    %v644 = vpack.c.bf16 %v639, %v639
    %v645 = vld [vmem:[%s6] sm:$0x1]
    %v647 = vpack.i.b16 %v645, %v645
    %v649 = vlaneseq
    %v650 = vshrl.u32 %v649, 7
    %v651 = vsub.s32 0, %v650
    %v652 = vrot.slane %v647, %v651
    %v653 = vadd.bf16 %v644, %v652
    %v654 = vmax.bf16 %v653, 0
    %v655 = vld [vmem:[#allocation7] sm:$0xf]
    %v656 = vld [vmem:[#allocation7 + $0x4] sm:$0xf]
    %v657 = vld [vmem:[#allocation7 + $0x8] sm:$0xf]
    %v658 = vld [vmem:[#allocation7 + $0xc] sm:$0xf]
    %v659 = vld [vmem:[#allocation7 + $0x10] sm:$0xf]
    %v660 = vld [vmem:[#allocation7 + $0x14] sm:$0xf]
    %v661 = vld [vmem:[#allocation7 + $0x18] sm:$0xf]
    %v662 = vld [vmem:[#allocation7 + $0x1c] sm:$0xf]
    %v663 = vld [vmem:[#allocation7 + $0x20] sm:$0xf]
    %v664 = vld [vmem:[#allocation7 + $0x24] sm:$0xf]
    %v665 = vld [vmem:[#allocation7 + $0x28] sm:$0xf]
    %v666 = vld [vmem:[#allocation7 + $0x2c] sm:$0xf]
    %v667 = vld [vmem:[#allocation7 + $0x30] sm:$0xf]
    %v668 = vld [vmem:[#allocation7 + $0x34] sm:$0xf]
    %v669 = vld [vmem:[#allocation7 + $0x38] sm:$0xf]
    %v670 = vld [vmem:[#allocation7 + $0x3c] sm:$0xf]
    %v671 = vld [vmem:[%s8] sm:$0x1]
    %v673 = vlaneseq
    %v674 = vshrl.u32 %v673, 7
    %v675 = vsub.s32 0, %v674
    %v676 = vrot.slane %v671, %v675
    %v694 = vunpack.c.l.b16 %v655
    %v695 = vunpack.c.l.b16 %v656
    %v696 = vunpack.c.l.b16 %v657
    %v697 = vunpack.c.l.b16 %v658
    %v698 = vunpack.c.l.b16 %v659
    %v699 = vunpack.c.l.b16 %v660
    %v700 = vunpack.c.l.b16 %v661
    %v701 = vunpack.c.l.b16 %v662
    %v702 = vunpack.c.l.b16 %v663
    %v703 = vunpack.c.l.b16 %v664
    %v704 = vunpack.c.l.b16 %v665
    %v705 = vunpack.c.l.b16 %v666
    %v706 = vunpack.c.l.b16 %v667
    %v707 = vunpack.c.l.b16 %v668
    %v708 = vunpack.c.l.b16 %v669
    %v709 = vunpack.c.l.b16 %v670
    %v710 = vpack.c.b16 %v695, %v694
    %v711 = vpack.c.b16 %v697, %v696
    %v712 = vpack.c.b16 %v699, %v698
    %v713 = vpack.c.b16 %v701, %v700
    %v714 = vpack.c.b16 %v703, %v702
    %v715 = vpack.c.b16 %v705, %v704
    %v716 = vpack.c.b16 %v707, %v706
    %v717 = vpack.c.b16 %v709, %v708
    %726 = vmatprep.subr.bf16.mxu0 0
    %727 = vmatpush1.bf16.msra.mxu0 %v710
    %728 = vmatprep.subr.bf16.mxu0 0
    %729 = vmatpush1.bf16.msra.mxu0 %v711
    %730 = vmatprep.subr.bf16.mxu0 0
    %731 = vmatpush1.bf16.msra.mxu0 %v712
    %732 = vmatprep.subr.bf16.mxu0 0
    %733 = vmatpush1.bf16.msra.mxu0 %v713
    %734 = vmatprep.subr.bf16.mxu0 0
    %735 = vmatpush1.bf16.msra.mxu0 %v714
    %736 = vmatprep.subr.bf16.mxu0 0
    %737 = vmatpush1.bf16.msra.mxu0 %v715
    %738 = vmatprep.subr.bf16.mxu0 0
    %739 = vmatpush1.bf16.msra.mxu0 %v716
    %740 = vmatprep.subr.bf16.mxu0 0
    %741 = vmatpush1.bf16.msra.mxu0 %v717
    %742 = vmatprep.subr.bf16.mxu0 0
    %743 = vmatpush1.bf16.msra.mxu0 0
    %744 = vmatprep.subr.bf16.mxu0 0
    %745 = vmatpush1.bf16.msra.mxu0 0
    %746 = vmatprep.subr.bf16.mxu0 0
    %747 = vmatpush1.bf16.msra.mxu0 0
    %748 = vmatprep.subr.bf16.mxu0 0
    %749 = vmatpush1.bf16.msra.mxu0 0
    %750 = vmatprep.subr.bf16.mxu0 0
    %751 = vmatpush1.bf16.msra.mxu0 0
    %752 = vmatprep.subr.bf16.mxu0 0
    %753 = vmatpush1.bf16.msra.mxu0 0
    %754 = vmatprep.subr.bf16.mxu0 0
    %755 = vmatpush1.bf16.msra.mxu0 0
    %756 = vmatprep.subr.bf16.mxu0 0
    %757 = vmatpush1.bf16.msra.mxu0 0
    %758 = vmatprep.mubr.bf16.mxu0 0
    %759 = vmatmul.mubr.bf16.gmra.mrb[0].mxu0 %v654
    %v760 = vpop.f32.mrb[0].mxu0
    %v761 = vadd.f32 %v676, %v760
    %v762 = vpop.f32.mrb[0].mxu0
    %v763 = vpop.f32.mrb[0].mxu0
    %v764 = vpop.f32.mrb[0].mxu0
    %765 = vdwg.mxu0
    %766 = vst [vmem:[#allocation8] sm:$0xff] %v761
    // Predicated region
    $region50: #{tpu_custom_call.1} parent=1 // pred_check
      _
    $region51: #{tpu_custom_call.1} parent=1 // pred_check_branch
      %768 = sbr.rel (0) target = $region53
    $region52: #{tpu_custom_call.1} parent=1 // pred_region
      %s770 = ssub.s32 128, 128
      %771 = vsyncadd [#allocation4], %s770
      %s773 = sshll.u32 [#allocation8], 4
      %s774 = int_to_ptr.vmem [resolvable:$true] %s773
      %776 = dma.vmem_to_hbm [thread:$0]  %s774, 128, %s9, [#allocation4]
    $region53: #{tpu_custom_call.1} parent=1 // pred_fallthru
      _
    // Predicated region
    $region54: #{tpu_custom_call.1} parent=1 // pred_check
      _
    $region55: #{tpu_custom_call.1} parent=1 // pred_check_branch
      %778 = sbr.rel (0) target = $region57
    $region56: #{tpu_custom_call.1} parent=1 // pred_region
      %779 = dma.done [#allocation4], 128
    $region57: #{tpu_custom_call.1} parent=1 // pred_fallthru
      _
    %780 = vsyncpa [#allocation3], 1
    %781 = vsyncpa [#allocation6], 1
    %782 = vsyncpa [#allocation4], 1

</llo_original>
